<compile_context>
chip_gen: v5e
topology: v5e:2x2
jax: 0.10.0
libtpu: 0.0.40
codegen_flags: <defaults>
</compile_context>

<pallas_src>
import functools
import math

import jax
import jax.numpy as jnp
from jax.experimental import pallas as pl
from jax.experimental.pallas import tpu as pltpu


BN_EPS = 1e-5


def round_up(x, m):
    return ((x + m - 1) // m) * m


def pad2d(x, rows, cols):
    r, c = x.shape
    if r == rows and c == cols:
        return x
    return jnp.pad(x, ((0, rows - r), (0, cols - c)))


# ---------------------------------------------------------------------------
# Pallas kernel: tiled matmul + bias + optional ReLU (BN scale pre-folded)
# ---------------------------------------------------------------------------

def matmul_bias_act_kernel(a_ref, w_ref, bias_ref, o_ref, acc_ref, *, activate):
    # a_ref: (TM, TK) bf16, w_ref: (TK, TN) bf16, bias_ref: (1, TN) f32,
    # o_ref: (TM, TN) out dtype, acc_ref: (TM, TN) f32 scratch (K-resident).
    k = pl.program_id(2)

    @pl.when(k == 0)
    def _():
        acc_ref[...] = jnp.zeros_like(acc_ref)

    acc_ref[...] += jnp.dot(a_ref[...], w_ref[...],
                            preferred_element_type=jnp.float32)

    @pl.when(k == pl.num_programs(2) - 1)
    def _():
        out = acc_ref[...] + bias_ref[...]
        if activate:
            out = jnp.maximum(out, 0.0)
        o_ref[...] = out.astype(o_ref.dtype)


def matmul_bias_act(a, w, bias, activate, out_dtype=jnp.float32):
    """(M, K) @ (K, N) + bias[N], optional ReLU.

    K and N are zero-padded to multiples of 128 (lane-dense, full MXU width);
    operands are cast to bf16 with f32 accumulation; output dtype selectable
    (bf16 for intermediate activations, f32 for the block output).
    """
    M, K = a.shape
    N = w.shape[1]

    # M tiles: cap at 256 so the M grid axis has >1 "parallel" step at
    # realistic sizes (megacore) while keeping per-step VMEM small.
    Mp = round_up(M, 8)
    TM = min(256, Mp)
    Mp = round_up(Mp, TM)

    # K tiles: lane-aligned (multiple of 128), reduction axis last in grid.
    Kp0 = round_up(K, 128)
    TK = min(512, Kp0)
    Kp = round_up(Kp0, TK)

    # N tiles: lane-dense output stores (unmasked vst).
    Np0 = round_up(N, 128)
    TN = min(256, Np0)
    Np = round_up(Np0, TN)

    a_p = pad2d(a, Mp, Kp).astype(jnp.bfloat16)
    w_p = pad2d(w, Kp, Np).astype(jnp.bfloat16)
    b_p = pad2d(bias.reshape(1, N).astype(jnp.float32), 1, Np)

    grid = (Mp // TM, Np // TN, Kp // TK)

    out = pl.pallas_call(
        functools.partial(matmul_bias_act_kernel, activate=activate),
        out_shape=jax.ShapeDtypeStruct((Mp, Np), out_dtype),
        grid=grid,
        in_specs=[
            pl.BlockSpec((TM, TK), lambda i, j, k: (i, k)),
            pl.BlockSpec((TK, TN), lambda i, j, k: (k, j)),
            pl.BlockSpec((1, TN), lambda i, j, k: (0, j)),
        ],
        out_specs=pl.BlockSpec((TM, TN), lambda i, j, k: (i, j)),
        scratch_shapes=[pltpu.VMEM((TM, TN), jnp.float32)],
        compiler_params=pltpu.CompilerParams(
            dimension_semantics=("parallel", "parallel", "arbitrary"),
            vmem_limit_bytes=32 * 1024 * 1024),
    )(a_p, w_p, b_p)
    return out[:M, :N]


# ---------------------------------------------------------------------------
# ResConv (Conv2d bias=False + folded BN + optional ReLU), NHWC activations
# ---------------------------------------------------------------------------

def res_conv_nhwc(x, w, bias, stride, padding, activate, out_dtype):
    """x: (B, H, W, C) bf16, w: (OC, IC, KH, KW) with BN scale folded in."""
    B, H, W, C = x.shape
    OC, IC, KH, KW = w.shape
    assert IC == C

    if KH == 1 and KW == 1 and padding == 0:
        # 1x1 conv: no im2col, just a (strided) reshape.
        xs = x[:, ::stride, ::stride, :] if stride > 1 else x
        OH, OW = xs.shape[1], xs.shape[2]
        patches = xs.reshape(B * OH * OW, C)
    else:
        OH = (H + 2 * padding - KH) // stride + 1
        OW = (W + 2 * padding - KW) // stride + 1
        x_p = jnp.pad(x, ((0, 0), (padding, padding), (padding, padding), (0, 0)))
        slabs = []
        for i in range(KH):
            for j in range(KW):
                slabs.append(x_p[:, i:i + stride * OH:stride,
                                 j:j + stride * OW:stride, :])
        # Single NHWC pass (bf16 slabs); patch columns ordered (kh, kw, c).
        patches = jnp.concatenate(slabs, axis=-1).reshape(B * OH * OW, KH * KW * C)

    # HWIO-flattened weight matches the (kh, kw, c) patch ordering.
    w_m = jnp.transpose(w, (2, 3, 1, 0)).reshape(KH * KW * IC, OC)
    out = matmul_bias_act(patches, w_m, bias, activate, out_dtype=out_dtype)
    return out.reshape(B, OH, OW, OC)


# ---------------------------------------------------------------------------
# Parameter construction (mirrors nn.Conv2d + nn.BatchNorm2d defaults, eval)
# ---------------------------------------------------------------------------

def make_res_conv_params(key, out_c, in_c, k):
    fan_in = in_c * k * k
    bound = math.sqrt(6.0 / fan_in)
    w = jax.random.uniform(key, (out_c, in_c, k, k), jnp.float32, -bound, bound)
    # BatchNorm2d eval defaults: gamma=1, beta=0, running_mean=0, running_var=1.
    gamma = jnp.ones((out_c,), jnp.float32)
    beta = jnp.zeros((out_c,), jnp.float32)
    rmean = jnp.zeros((out_c,), jnp.float32)
    rvar = jnp.ones((out_c,), jnp.float32)
    scale = gamma / jnp.sqrt(rvar + BN_EPS)
    bias = beta - rmean * scale
    # Fold BN scale into the weights so the kernel epilogue is add-bias (+ReLU).
    w_folded = w * scale[:, None, None, None]
    return {"w": w_folded, "bias": bias}


def build_bottleneck_params(key, in_channels, out_channels):
    mid = out_channels // 4
    k1, k2, k3 = jax.random.split(key, 3)
    return {
        "conv1": make_res_conv_params(k1, mid, in_channels, 1),
        "conv2": make_res_conv_params(k2, mid, mid, 3),
        "conv3": make_res_conv_params(k3, out_channels, mid, 1),
    }


# ---------------------------------------------------------------------------
# ResBottleneck forward: 1x1 (act) -> 3x3 (act) -> 1x1 (no act)
# ---------------------------------------------------------------------------

def res_bottleneck_forward(params, x_nchw, stride, conv1_stride):
    s1 = stride if conv1_stride else 1
    s2 = 1 if conv1_stride else stride
    # NCHW -> NHWC once; activations flow in bf16 (f32 accumulation in-kernel).
    x = jnp.transpose(x_nchw, (0, 2, 3, 1)).astype(jnp.bfloat16)
    p = params["conv1"]
    x = res_conv_nhwc(x, p["w"], p["bias"], stride=s1, padding=0,
                      activate=True, out_dtype=jnp.bfloat16)
    p = params["conv2"]
    x = res_conv_nhwc(x, p["w"], p["bias"], stride=s2, padding=1,
                      activate=True, out_dtype=jnp.bfloat16)
    p = params["conv3"]
    x = res_conv_nhwc(x, p["w"], p["bias"], stride=1, padding=0,
                      activate=False, out_dtype=jnp.float32)
    return jnp.transpose(x, (0, 3, 1, 2))            # NHWC -> NCHW (once)


# ---------------------------------------------------------------------------
# Pure-JAX reference (same bf16 operand precision, for a sanity check only)
# ---------------------------------------------------------------------------

def ref_conv_bn(x, p, stride, padding, activate):
    y = jax.lax.conv_general_dilated(
        x.astype(jnp.bfloat16), p["w"].astype(jnp.bfloat16),
        (stride, stride), [(padding, padding), (padding, padding)],
        dimension_numbers=("NCHW", "OIHW", "NCHW"),
        preferred_element_type=jnp.float32)
    y = y + p["bias"][None, :, None, None]
    return jnp.maximum(y, 0.0) if activate else y


def res_bottleneck_reference(params, x, stride, conv1_stride):
    s1 = stride if conv1_stride else 1
    s2 = 1 if conv1_stride else stride
    x = ref_conv_bn(x, params["conv1"], s1, 0, True)
    x = ref_conv_bn(x, params["conv2"], s2, 1, True)
    x = ref_conv_bn(x, params["conv3"], 1, 0, False)
    return x


# ---------------------------------------------------------------------------

if __name__ == "__main__":
    in_channels = 32
    out_channels = 64          # mid_channels = 16
    stride = 2
    conv1_stride = False       # stride carried by the 3x3 conv
    B, H, W = 2, 16, 16

    key = jax.random.PRNGKey(0)
    kp, kx = jax.random.split(key)
    params = build_bottleneck_params(kp, in_channels, out_channels)
    x = jax.random.normal(kx, (B, in_channels, H, W), jnp.float32)

    fwd = jax.jit(functools.partial(
        res_bottleneck_forward, params, stride=stride, conv1_stride=conv1_stride))
    out = jax.block_until_ready(fwd(x))
    assert out.shape == (B, out_channels, H // stride, W // stride), out.shape

    ref = jax.block_until_ready(
        res_bottleneck_reference(params, x, stride, conv1_stride))
    err = float(jnp.max(jnp.abs(out - ref)))
    assert err < 5e-2, f"mismatch vs reference: {err}"

    print("KERNEL_OK")
</pallas_src>

<mosaic_0001>
module attributes {stable_mosaic.version = 11 : i64} {
  func.func @matmul_bias_act_kernel(%arg0: i32, %arg1: i32, %arg2: i32, %arg3: memref<256x128xbf16, #tpu.memory_space<vmem>>, %arg4: memref<128x128xbf16, #tpu.memory_space<vmem>>, %arg5: memref<1x128xf32, #tpu.memory_space<vmem>>, %arg6: memref<256x128xbf16, #tpu.memory_space<vmem>>, %arg7: memref<256x128xf32, #tpu.memory_space<vmem>>) attributes {dimension_semantics = [#tpu.dimension_semantics<parallel>, #tpu.dimension_semantics<parallel>, #tpu.dimension_semantics<arbitrary>], iteration_bounds = array<i64: 2, 1, 1>, scalar_prefetch = 0 : i64, scratch_operands = 1 : i64, tpu.core_type = #tpu.core_type<tc>, window_params = [{transform_indices = @transform_0, window_bounds = array<i64: 256, 128>}, {transform_indices = @transform_1, window_bounds = array<i64: 128, 128>}, {transform_indices = @transform_2, window_bounds = array<i64: 1, 128>}, {transform_indices = @transform_3, window_bounds = array<i64: 256, 128>}]} {
    %c0_i32 = arith.constant 0 : i32
    %0 = arith.cmpi eq, %arg2, %c0_i32 : i32
    %1 = arith.extui %0 : i1 to i32
    %c0_i32_0 = arith.constant 0 : i32
    %2 = arith.cmpi ne, %1, %c0_i32_0 : i32
    scf.if %2 {
      %cst_10 = arith.constant 0.000000e+00 : f32
      %12 = vector.broadcast %cst_10 : f32 to vector<256x128xf32>
      %c0_11 = arith.constant 0 : index
      %c0_12 = arith.constant 0 : index
      %13 = vector.load %arg7[%c0_11, %c0_12] : memref<256x128xf32, #tpu.memory_space<vmem>>, vector<256x128xf32>
      tpu.vector_store %arg7[%c0_11, %c0_12], %12 {strides = array<i32>} : memref<256x128xf32, #tpu.memory_space<vmem>>, vector<256x128xf32>,
    } else {
    }
    %c0 = arith.constant 0 : index
    %c0_1 = arith.constant 0 : index
    %3 = vector.load %arg7[%c0, %c0_1] : memref<256x128xf32, #tpu.memory_space<vmem>>, vector<256x128xf32>
    %c0_2 = arith.constant 0 : index
    %c0_3 = arith.constant 0 : index
    %4 = vector.load %arg3[%c0_2, %c0_3] : memref<256x128xbf16, #tpu.memory_space<vmem>>, vector<256x128xbf16>
    %c0_4 = arith.constant 0 : index
    %c0_5 = arith.constant 0 : index
    %5 = vector.load %arg4[%c0_4, %c0_5] : memref<128x128xbf16, #tpu.memory_space<vmem>>, vector<128x128xbf16>
    %cst = arith.constant dense<0.000000e+00> : vector<256x128xf32>
    %6 = tpu.matmul %4, %5, %cst {dimension_numbers = #tpu.dot_dimension_numbers<[1], [0], [0], [1], [0, 0, 1, 1], [], []>} : vector<256x128xbf16>, vector<128x128xbf16>, vector<256x128xf32> -> vector<256x128xf32>
    %7 = arith.addf %3, %6 : vector<256x128xf32>
    %c0_6 = arith.constant 0 : index
    %c0_7 = arith.constant 0 : index
    %8 = vector.load %arg7[%c0_6, %c0_7] : memref<256x128xf32, #tpu.memory_space<vmem>>, vector<256x128xf32>
    tpu.vector_store %arg7[%c0_6, %c0_7], %7 {strides = array<i32>} : memref<256x128xf32, #tpu.memory_space<vmem>>, vector<256x128xf32>,
    %c0_i32_8 = arith.constant 0 : i32
    %9 = arith.cmpi eq, %arg2, %c0_i32_8 : i32
    %10 = arith.extui %9 : i1 to i32
    %c0_i32_9 = arith.constant 0 : i32
    %11 = arith.cmpi ne, %10, %c0_i32_9 : i32
    scf.if %11 {
      %c0_10 = arith.constant 0 : index
      %c0_11 = arith.constant 0 : index
      %12 = vector.load %arg7[%c0_10, %c0_11] : memref<256x128xf32, #tpu.memory_space<vmem>>, vector<256x128xf32>
      %c0_12 = arith.constant 0 : index
      %c0_13 = arith.constant 0 : index
      %13 = vector.load %arg5[%c0_12, %c0_13] : memref<1x128xf32, #tpu.memory_space<vmem>>, vector<1x128xf32>
      %14 = vector.broadcast %13 : vector<1x128xf32> to vector<256x128xf32>
      %15 = arith.addf %12, %14 : vector<256x128xf32>
      %cst_14 = arith.constant 0.000000e+00 : f32
      %16 = vector.broadcast %cst_14 : f32 to vector<256x128xf32>
      %17 = arith.maximumf %15, %16 : vector<256x128xf32>
      %18 = arith.truncf %17 : vector<256x128xf32> to vector<256x128xbf16>
      %c0_15 = arith.constant 0 : index
      %c0_16 = arith.constant 0 : index
      %19 = vector.load %arg6[%c0_15, %c0_16] : memref<256x128xbf16, #tpu.memory_space<vmem>>, vector<256x128xbf16>
      tpu.vector_store %arg6[%c0_15, %c0_16], %18 {strides = array<i32>} : memref<256x128xbf16, #tpu.memory_space<vmem>>, vector<256x128xbf16>,
    } else {
    }
    return
  }
  func.func @transform_0(%arg0: i32, %arg1: i32, %arg2: i32) -> (i32, i32) {
    %c0_i32 = arith.constant 0 : i32
    return %arg0, %arg2 : i32, i32
  }
  func.func @transform_1(%arg0: i32, %arg1: i32, %arg2: i32) -> (i32, i32) {
    %c0_i32 = arith.constant 0 : i32
    return %arg2, %arg1 : i32, i32
  }
  func.func @transform_2(%arg0: i32, %arg1: i32, %arg2: i32) -> (i32, i32) {
    %c0_i32 = arith.constant 0 : i32
    %c0_i32_0 = arith.constant 0 : i32
    return %c0_i32, %arg1 : i32, i32
  }
  func.func @transform_3(%arg0: i32, %arg1: i32, %arg2: i32) -> (i32, i32) {
    %c0_i32 = arith.constant 0 : i32
    return %arg0, %arg1 : i32, i32
  }
}

module attributes {stable_mosaic.version = 11 : i64} {
  func.func @matmul_bias_act_kernel(%arg0: i32, %arg1: i32, %arg2: i32, %arg3: memref<128x256xbf16, #tpu.memory_space<vmem>>, %arg4: memref<256x128xbf16, #tpu.memory_space<vmem>>, %arg5: memref<1x128xf32, #tpu.memory_space<vmem>>, %arg6: memref<128x128xbf16, #tpu.memory_space<vmem>>, %arg7: memref<128x128xf32, #tpu.memory_space<vmem>>) attributes {dimension_semantics = [#tpu.dimension_semantics<parallel>, #tpu.dimension_semantics<parallel>, #tpu.dimension_semantics<arbitrary>], iteration_bounds = array<i64: 1, 1, 1>, scalar_prefetch = 0 : i64, scratch_operands = 1 : i64, tpu.core_type = #tpu.core_type<tc>, window_params = [{transform_indices = @transform_0, window_bounds = array<i64: 128, 256>}, {transform_indices = @transform_1, window_bounds = array<i64: 256, 128>}, {transform_indices = @transform_2, window_bounds = array<i64: 1, 128>}, {transform_indices = @transform_3, window_bounds = array<i64: 128, 128>}]} {
    %c0_i32 = arith.constant 0 : i32
    %0 = arith.cmpi eq, %arg2, %c0_i32 : i32
    %1 = arith.extui %0 : i1 to i32
    %c0_i32_0 = arith.constant 0 : i32
    %2 = arith.cmpi ne, %1, %c0_i32_0 : i32
    scf.if %2 {
      %cst_10 = arith.constant 0.000000e+00 : f32
      %12 = vector.broadcast %cst_10 : f32 to vector<128x128xf32>
      %c0_11 = arith.constant 0 : index
      %c0_12 = arith.constant 0 : index
      %13 = vector.load %arg7[%c0_11, %c0_12] : memref<128x128xf32, #tpu.memory_space<vmem>>, vector<128x128xf32>
      tpu.vector_store %arg7[%c0_11, %c0_12], %12 {strides = array<i32>} : memref<128x128xf32, #tpu.memory_space<vmem>>, vector<128x128xf32>,
    } else {
    }
    %c0 = arith.constant 0 : index
    %c0_1 = arith.constant 0 : index
    %3 = vector.load %arg7[%c0, %c0_1] : memref<128x128xf32, #tpu.memory_space<vmem>>, vector<128x128xf32>
    %c0_2 = arith.constant 0 : index
    %c0_3 = arith.constant 0 : index
    %4 = vector.load %arg3[%c0_2, %c0_3] : memref<128x256xbf16, #tpu.memory_space<vmem>>, vector<128x256xbf16>
    %c0_4 = arith.constant 0 : index
    %c0_5 = arith.constant 0 : index
    %5 = vector.load %arg4[%c0_4, %c0_5] : memref<256x128xbf16, #tpu.memory_space<vmem>>, vector<256x128xbf16>
    %cst = arith.constant dense<0.000000e+00> : vector<128x128xf32>
    %6 = tpu.matmul %4, %5, %cst {dimension_numbers = #tpu.dot_dimension_numbers<[1], [0], [0], [1], [0, 0, 1, 1], [], []>} : vector<128x256xbf16>, vector<256x128xbf16>, vector<128x128xf32> -> vector<128x128xf32>
    %7 = arith.addf %3, %6 : vector<128x128xf32>
    %c0_6 = arith.constant 0 : index
    %c0_7 = arith.constant 0 : index
    %8 = vector.load %arg7[%c0_6, %c0_7] : memref<128x128xf32, #tpu.memory_space<vmem>>, vector<128x128xf32>
    tpu.vector_store %arg7[%c0_6, %c0_7], %7 {strides = array<i32>} : memref<128x128xf32, #tpu.memory_space<vmem>>, vector<128x128xf32>,
    %c0_i32_8 = arith.constant 0 : i32
    %9 = arith.cmpi eq, %arg2, %c0_i32_8 : i32
    %10 = arith.extui %9 : i1 to i32
    %c0_i32_9 = arith.constant 0 : i32
    %11 = arith.cmpi ne, %10, %c0_i32_9 : i32
    scf.if %11 {
      %c0_10 = arith.constant 0 : index
      %c0_11 = arith.constant 0 : index
      %12 = vector.load %arg7[%c0_10, %c0_11] : memref<128x128xf32, #tpu.memory_space<vmem>>, vector<128x128xf32>
      %c0_12 = arith.constant 0 : index
      %c0_13 = arith.constant 0 : index
      %13 = vector.load %arg5[%c0_12, %c0_13] : memref<1x128xf32, #tpu.memory_space<vmem>>, vector<1x128xf32>
      %14 = vector.broadcast %13 : vector<1x128xf32> to vector<128x128xf32>
      %15 = arith.addf %12, %14 : vector<128x128xf32>
      %cst_14 = arith.constant 0.000000e+00 : f32
      %16 = vector.broadcast %cst_14 : f32 to vector<128x128xf32>
      %17 = arith.maximumf %15, %16 : vector<128x128xf32>
      %18 = arith.truncf %17 : vector<128x128xf32> to vector<128x128xbf16>
      %c0_15 = arith.constant 0 : index
      %c0_16 = arith.constant 0 : index
      %19 = vector.load %arg6[%c0_15, %c0_16] : memref<128x128xbf16, #tpu.memory_space<vmem>>, vector<128x128xbf16>
      tpu.vector_store %arg6[%c0_15, %c0_16], %18 {strides = array<i32>} : memref<128x128xbf16, #tpu.memory_space<vmem>>, vector<128x128xbf16>,
    } else {
    }
    return
  }
  func.func @transform_0(%arg0: i32, %arg1: i32, %arg2: i32) -> (i32, i32) {
    %c0_i32 = arith.constant 0 : i32
    return %arg0, %arg2 : i32, i32
  }
  func.func @transform_1(%arg0: i32, %arg1: i32, %arg2: i32) -> (i32, i32) {
    %c0_i32 = arith.constant 0 : i32
    return %arg2, %arg1 : i32, i32
  }
  func.func @transform_2(%arg0: i32, %arg1: i32, %arg2: i32) -> (i32, i32) {
    %c0_i32 = arith.constant 0 : i32
    %c0_i32_0 = arith.constant 0 : i32
    return %c0_i32, %arg1 : i32, i32
  }
  func.func @transform_3(%arg0: i32, %arg1: i32, %arg2: i32) -> (i32, i32) {
    %c0_i32 = arith.constant 0 : i32
    return %arg0, %arg1 : i32, i32
  }
}

module attributes {stable_mosaic.version = 11 : i64} {
  func.func @matmul_bias_act_kernel(%arg0: i32, %arg1: i32, %arg2: i32, %arg3: memref<128x128xbf16, #tpu.memory_space<vmem>>, %arg4: memref<128x128xbf16, #tpu.memory_space<vmem>>, %arg5: memref<1x128xf32, #tpu.memory_space<vmem>>, %arg6: memref<128x128xf32, #tpu.memory_space<vmem>>, %arg7: memref<128x128xf32, #tpu.memory_space<vmem>>) attributes {dimension_semantics = [#tpu.dimension_semantics<parallel>, #tpu.dimension_semantics<parallel>, #tpu.dimension_semantics<arbitrary>], iteration_bounds = array<i64: 1, 1, 1>, scalar_prefetch = 0 : i64, scratch_operands = 1 : i64, tpu.core_type = #tpu.core_type<tc>, window_params = [{transform_indices = @transform_0, window_bounds = array<i64: 128, 128>}, {transform_indices = @transform_1, window_bounds = array<i64: 128, 128>}, {transform_indices = @transform_2, window_bounds = array<i64: 1, 128>}, {transform_indices = @transform_3, window_bounds = array<i64: 128, 128>}]} {
    %c0_i32 = arith.constant 0 : i32
    %0 = arith.cmpi eq, %arg2, %c0_i32 : i32
    %1 = arith.extui %0 : i1 to i32
    %c0_i32_0 = arith.constant 0 : i32
    %2 = arith.cmpi ne, %1, %c0_i32_0 : i32
    scf.if %2 {
      %cst_10 = arith.constant 0.000000e+00 : f32
      %12 = vector.broadcast %cst_10 : f32 to vector<128x128xf32>
      %c0_11 = arith.constant 0 : index
      %c0_12 = arith.constant 0 : index
      %13 = vector.load %arg7[%c0_11, %c0_12] : memref<128x128xf32, #tpu.memory_space<vmem>>, vector<128x128xf32>
      tpu.vector_store %arg7[%c0_11, %c0_12], %12 {strides = array<i32>} : memref<128x128xf32, #tpu.memory_space<vmem>>, vector<128x128xf32>,
    } else {
    }
    %c0 = arith.constant 0 : index
    %c0_1 = arith.constant 0 : index
    %3 = vector.load %arg7[%c0, %c0_1] : memref<128x128xf32, #tpu.memory_space<vmem>>, vector<128x128xf32>
    %c0_2 = arith.constant 0 : index
    %c0_3 = arith.constant 0 : index
    %4 = vector.load %arg3[%c0_2, %c0_3] : memref<128x128xbf16, #tpu.memory_space<vmem>>, vector<128x128xbf16>
    %c0_4 = arith.constant 0 : index
    %c0_5 = arith.constant 0 : index
    %5 = vector.load %arg4[%c0_4, %c0_5] : memref<128x128xbf16, #tpu.memory_space<vmem>>, vector<128x128xbf16>
    %cst = arith.constant dense<0.000000e+00> : vector<128x128xf32>
    %6 = tpu.matmul %4, %5, %cst {dimension_numbers = #tpu.dot_dimension_numbers<[1], [0], [0], [1], [0, 0, 1, 1], [], []>} : vector<128x128xbf16>, vector<128x128xbf16>, vector<128x128xf32> -> vector<128x128xf32>
    %7 = arith.addf %3, %6 : vector<128x128xf32>
    %c0_6 = arith.constant 0 : index
    %c0_7 = arith.constant 0 : index
    %8 = vector.load %arg7[%c0_6, %c0_7] : memref<128x128xf32, #tpu.memory_space<vmem>>, vector<128x128xf32>
    tpu.vector_store %arg7[%c0_6, %c0_7], %7 {strides = array<i32>} : memref<128x128xf32, #tpu.memory_space<vmem>>, vector<128x128xf32>,
    %c0_i32_8 = arith.constant 0 : i32
    %9 = arith.cmpi eq, %arg2, %c0_i32_8 : i32
    %10 = arith.extui %9 : i1 to i32
    %c0_i32_9 = arith.constant 0 : i32
    %11 = arith.cmpi ne, %10, %c0_i32_9 : i32
    scf.if %11 {
      %c0_10 = arith.constant 0 : index
      %c0_11 = arith.constant 0 : index
      %12 = vector.load %arg7[%c0_10, %c0_11] : memref<128x128xf32, #tpu.memory_space<vmem>>, vector<128x128xf32>
      %c0_12 = arith.constant 0 : index
      %c0_13 = arith.constant 0 : index
      %13 = vector.load %arg5[%c0_12, %c0_13] : memref<1x128xf32, #tpu.memory_space<vmem>>, vector<1x128xf32>
      %14 = vector.broadcast %13 : vector<1x128xf32> to vector<128x128xf32>
      %15 = arith.addf %12, %14 : vector<128x128xf32>
      %c0_14 = arith.constant 0 : index
      %c0_15 = arith.constant 0 : index
      %16 = vector.load %arg6[%c0_14, %c0_15] : memref<128x128xf32, #tpu.memory_space<vmem>>, vector<128x128xf32>
      tpu.vector_store %arg6[%c0_14, %c0_15], %15 {strides = array<i32>} : memref<128x128xf32, #tpu.memory_space<vmem>>, vector<128x128xf32>,
    } else {
    }
    return
  }
  func.func @transform_0(%arg0: i32, %arg1: i32, %arg2: i32) -> (i32, i32) {
    %c0_i32 = arith.constant 0 : i32
    return %arg0, %arg2 : i32, i32
  }
  func.func @transform_1(%arg0: i32, %arg1: i32, %arg2: i32) -> (i32, i32) {
    %c0_i32 = arith.constant 0 : i32
    return %arg2, %arg1 : i32, i32
  }
  func.func @transform_2(%arg0: i32, %arg1: i32, %arg2: i32) -> (i32, i32) {
    %c0_i32 = arith.constant 0 : i32
    %c0_i32_0 = arith.constant 0 : i32
    return %c0_i32, %arg1 : i32, i32
  }
  func.func @transform_3(%arg0: i32, %arg1: i32, %arg2: i32) -> (i32, i32) {
    %c0_i32 = arith.constant 0 : i32
    return %arg0, %arg1 : i32, i32
  }
}

</mosaic_0001>

<llo_original>
// kernel: res_bottleneck_forward.3
$region0: #{res_bottleneck_forward.3}
  #allocation0 [shape = 'u32[]', space=smem, size = 0x4, offset = 0x4, fixed_abs, tag = 'smem constant byte address 0x4 - core index']
  #allocation1 [shape = 'u32[72,128]{1,0:T(1,128)}', space=vmem, size = 0x9000, scoped, tag = 'internal scratch']
  #allocation2 [shape = 'f32[256,128]{1,0:T(8,128)}', space=vmem, size = 0x20000, scoped, tag = 'scratch operand']
  %s0 = inlined_call_operand.vmem [shape: bf16[512,128], index: 0, kind: input, shape index: {}]
  %s1 = inlined_call_operand.vmem [shape: bf16[128,128], index: 1, kind: input, shape index: {}]
  %s2 = inlined_call_operand.vmem [shape: f32[1,128], index: 2, kind: input, shape index: {}]
  %s3 = inlined_call_operand.vmem [shape: bf16[512,128], index: 3, kind: output, shape index: {}]
  %s4 = sld [smem:[#allocation0]]
  $region53: #{res_bottleneck_forward.3} parent=0
    _
  %s6 = ssub.s32 1, %s4
  %s7 = scalar_select 0, %s6, %s4
  loop: start=0, step=1, limit=4
  $region2: #{res_bottleneck_forward.3} parent=0 // loop_pre_header
    _
  $region3: #{res_bottleneck_forward.3} parent=0 // loop_header
    %s9 = sphi 0, %s13
    %p10 = scmp.ge.s32.totalorder %s9, 4
    %s16 = sphi 0, %s35
    %s17 = sphi 0, %s31
    %s18 = sphi 0, %s27
    %s19 = sphi 0, %s16
    %s20 = sphi 0, %s17
    %s21 = sphi 0, %s18
    %s22 = sphi 0, %s19
    %s23 = sphi 0, %s20
    %s24 = sphi 0, %s21
    %s40 = sphi 0, %s42
    %s43 = sphi 0, %s40
    %s44 = sphi 0, %s43
    %s60 = sphi 0, %s44
    %s68 = sphi 0, %s70
    %s71 = sphi 0, %s68
    %s72 = sphi 0, %s71
    %s88 = sphi 0, %s72
    %s94 = sphi 0, %s96
    %s97 = sphi 0, %s94
    %s98 = sphi 0, %s97
    %s114 = sphi 0, %s98
    %s122 = sphi 0, %s124
    %s125 = sphi 0, %s122
    %s126 = sphi 0, %s125
    %s142 = sphi 0, %s126
  $region4: #{res_bottleneck_forward.3} parent=0 // loop_header_branch
    %12 = sbr.rel (%p10) target = $region8
  $region5: #{res_bottleneck_forward.3} parent=0 // loop_body
    %s14 = ssub.s32 %s9, 1
    %s15 = ssub.s32 %s9, 2
    %s25 = sadd.s32 1, %s18
    %p26 = scmp.ge.s32.totalorder %s25, 1
    %s27 = scalar_select %p26, 0, %s25
    %s28 = sadd.s32 1, %s17
    %s29 = scalar_select %p26, %s28, %s17
    %p30 = scmp.ge.s32.totalorder %s29, 1
    %s31 = scalar_select %p30, 0, %s29
    %s32 = sadd.s32 1, %s16
    %s33 = scalar_select %p30, %s32, %s16
    %p34 = scmp.ge.s32.totalorder %s33, 2
    %s35 = scalar_select %p34, 0, %s33
    %s36 = ssub.s32 %s16, %s35
    %s37 = ssub.s32 %s18, %s27
    %s38 = sor.u32 %s36, %s37
    %p39 = scmp.eq.s32.totalorder %s38, 0
    %s41 = sadd.s32 %s40, 1
    %s42 = scalar_select %p39, %s40, %s41
    %p45 = pneg %p39
    %p46 = scmp.eq.s32.totalorder %s9, 1
    %p47 = por %p45, %p46
    %p48 = scmp.ne.s32.totalorder %s40, %s43
    %p49 = scmp.eq.s32.totalorder %s9, 0
    %p50 = por %p48, %p49
    %p51 = scmp.ne.s32.totalorder %s40, %s43
    %p52 = scmp.eq.s32.totalorder %s14, 1
    %p53 = por %p51, %p52
    %p54 = scmp.ne.s32.totalorder %s43, %s44
    %p55 = scmp.eq.s32.totalorder %s14, 0
    %p56 = por %p54, %p55
    %p57 = scmp.ne.s32.totalorder %s43, %s44
    %p58 = scmp.eq.s32.totalorder %s15, 1
    %p59 = por %p57, %p58
    %p61 = scmp.ne.s32.totalorder %s44, %s60
    %p62 = scmp.eq.s32.totalorder %s15, 0
    %p63 = por %p61, %p62
    %s64 = ssub.s32 %s18, %s27
    %s65 = ssub.s32 %s17, %s31
    %s66 = sor.u32 %s64, %s65
    %p67 = scmp.eq.s32.totalorder %s66, 0
    %s69 = sadd.s32 %s68, 1
    %s70 = scalar_select %p67, %s68, %s69
    %p73 = pneg %p67
    %p74 = scmp.eq.s32.totalorder %s9, 1
    %p75 = por %p73, %p74
    %p76 = scmp.ne.s32.totalorder %s68, %s71
    %p77 = scmp.eq.s32.totalorder %s9, 0
    %p78 = por %p76, %p77
    %p79 = scmp.ne.s32.totalorder %s68, %s71
    %p80 = scmp.eq.s32.totalorder %s14, 1
    %p81 = por %p79, %p80
    %p82 = scmp.ne.s32.totalorder %s71, %s72
    %p83 = scmp.eq.s32.totalorder %s14, 0
    %p84 = por %p82, %p83
    %p85 = scmp.ne.s32.totalorder %s71, %s72
    %p86 = scmp.eq.s32.totalorder %s15, 1
    %p87 = por %p85, %p86
    %p89 = scmp.ne.s32.totalorder %s72, %s88
    %p90 = scmp.eq.s32.totalorder %s15, 0
    %p91 = por %p89, %p90
    %s92 = ssub.s32 %s17, %s31
    %p93 = scmp.eq.s32.totalorder %s92, 0
    %s95 = sadd.s32 %s94, 1
    %s96 = scalar_select %p93, %s94, %s95
    %p99 = pneg %p93
    %p100 = scmp.eq.s32.totalorder %s9, 1
    %p101 = por %p99, %p100
    %p102 = scmp.ne.s32.totalorder %s94, %s97
    %p103 = scmp.eq.s32.totalorder %s9, 0
    %p104 = por %p102, %p103
    %p105 = scmp.ne.s32.totalorder %s94, %s97
    %p106 = scmp.eq.s32.totalorder %s14, 1
    %p107 = por %p105, %p106
    %p108 = scmp.ne.s32.totalorder %s97, %s98
    %p109 = scmp.eq.s32.totalorder %s14, 0
    %p110 = por %p108, %p109
    %p111 = scmp.ne.s32.totalorder %s97, %s98
    %p112 = scmp.eq.s32.totalorder %s15, 1
    %p113 = por %p111, %p112
    %p115 = scmp.ne.s32.totalorder %s98, %s114
    %p116 = scmp.eq.s32.totalorder %s15, 0
    %p117 = por %p115, %p116
    %s118 = ssub.s32 %s16, %s35
    %s119 = ssub.s32 %s17, %s31
    %s120 = sor.u32 %s118, %s119
    %p121 = scmp.eq.s32.totalorder %s120, 0
    %s123 = sadd.s32 %s122, 1
    %s124 = scalar_select %p121, %s122, %s123
    %p127 = pneg %p121
    %p128 = scmp.eq.s32.totalorder %s9, 1
    %p129 = por %p127, %p128
    %p130 = scmp.ne.s32.totalorder %s122, %s125
    %p131 = scmp.eq.s32.totalorder %s9, 0
    %p132 = por %p130, %p131
    %p133 = scmp.ne.s32.totalorder %s122, %s125
    %p134 = scmp.eq.s32.totalorder %s14, 1
    %p135 = por %p133, %p134
    %p136 = scmp.ne.s32.totalorder %s125, %s126
    %p137 = scmp.eq.s32.totalorder %s14, 0
    %p138 = por %p136, %p137
    %p139 = scmp.ne.s32.totalorder %s125, %s126
    %p140 = scmp.eq.s32.totalorder %s15, 1
    %p141 = por %p139, %p140
    %p143 = scmp.ne.s32.totalorder %s126, %s142
    %p144 = scmp.eq.s32.totalorder %s15, 0
    %p145 = por %p143, %p144
    %p146 = scmp.le.s32.totalorder 1, %s9
    %p147 = scmp.lt.s32.totalorder %s9, 3
    %p148 = pnand %p146, %p147
    %p149 = pneg %p148
    // Predicated region
    $region9: #{res_bottleneck_forward.3} parent=5 // pred_check
      _
    $region10: #{res_bottleneck_forward.3} parent=5 // pred_check_branch
      %151 = sbr.rel (%p148) target = $region12
    $region11: #{res_bottleneck_forward.3} parent=5 // pred_region
      %s152 = ssub.s32 %s9, 1
      // Predicated region
      $region13: #{res_bottleneck_forward.3} parent=11 // pred_check
        %p153 = pneg %p84
      $region14: #{res_bottleneck_forward.3} parent=11 // pred_check_branch
        %155 = sbr.rel (%p153) target = $region16
      $region15: #{res_bottleneck_forward.3} parent=11 // pred_region
        %s156 = smul.u32 16, %s21
        %p157 = scmp.lt.s32.totalorder %s156, 15
        %s158 = scalar_select %p157, %s156, 15
        %p159 = scmp.lt.s32.totalorder %s20, 0
        %s160 = scalar_select %p159, %s20, 0
        %s161 = sadd.s32 %s160, %s158
        %s162 = smul.addr %s161, 4
        %s163 = scalar_lea.vmem %s1, %s162
        %s164 = smul.u32 16, %s21
      $region16: #{res_bottleneck_forward.3} parent=11 // pred_fallthru
        _
      // Predicated region
      $region17: #{res_bottleneck_forward.3} parent=11 // pred_check
        %p165 = pneg %p110
      $region18: #{res_bottleneck_forward.3} parent=11 // pred_check_branch
        %167 = sbr.rel (%p165) target = $region20
      $region19: #{res_bottleneck_forward.3} parent=11 // pred_region
        %p168 = scmp.lt.s32.totalorder %s20, 0
        %s169 = scalar_select %p168, %s20, 0
        %s170 = scalar_lea.vmem %s2, %s169
      $region20: #{res_bottleneck_forward.3} parent=11 // pred_fallthru
        _
    $region12: #{res_bottleneck_forward.3} parent=5 // pred_fallthru
      _
    %p171 = scmp.lt.s32.totalorder %s9, 2
    // Predicated region
    $region21: #{res_bottleneck_forward.3} parent=5 // pred_check
      %p172 = pneg %p171
    $region22: #{res_bottleneck_forward.3} parent=5 // pred_check_branch
      %174 = sbr.rel (%p172) target = $region24
    $region23: #{res_bottleneck_forward.3} parent=5 // pred_region
      // Predicated region
      $region25: #{res_bottleneck_forward.3} parent=23 // pred_check
        %p175 = pneg %p50
      $region26: #{res_bottleneck_forward.3} parent=23 // pred_check_branch
        %177 = sbr.rel (%p175) target = $region28
      $region27: #{res_bottleneck_forward.3} parent=23 // pred_region
        %s178 = smul.u32 32, %s16
        %p179 = scmp.lt.s32.totalorder %s178, 63
        %s180 = scalar_select %p179, %s178, 63
        %p181 = scmp.lt.s32.totalorder %s18, 0
        %s182 = scalar_select %p181, %s18, 0
        %s183 = sadd.s32 %s182, %s180
        %s184 = smul.addr %s183, 4
        %s185 = scalar_lea.vmem %s0, %s184
        %s186 = smul.u32 32, %s16
      $region28: #{res_bottleneck_forward.3} parent=23 // pred_fallthru
        _
    $region24: #{res_bottleneck_forward.3} parent=5 // pred_fallthru
      _
    %p187 = scmp.le.s32.totalorder 1, %s9
    %p188 = scmp.lt.s32.totalorder %s9, 3
    %p189 = pnand %p187, %p188
    %p190 = pneg %p189
    // Predicated region
    $region29: #{res_bottleneck_forward.3} parent=5 // pred_check
      _
    $region30: #{res_bottleneck_forward.3} parent=5 // pred_check_branch
      %192 = sbr.rel (%p189) target = $region32
    $region31: #{res_bottleneck_forward.3} parent=5 // pred_region
      %s193 = ssub.s32 %s9, 1
      %s194 = smul.u32 32, %s19
      %p195 = scmp.lt.s32.totalorder %s194, 63
      %s196 = scalar_select %p195, %s194, 63
      %p197 = scmp.lt.s32.totalorder %s21, 0
      %s198 = scalar_select %p197, %s21, 0
      %s199 = sadd.s32 %s198, %s196
      %s200 = smul.addr %s199, 4
      %s201 = scalar_lea.vmem %s0, %s200
      %p202 = pneg %p56
      %p203 = pneg %p53
      %s204 = smul.u32 16, %s21
      %p205 = scmp.lt.s32.totalorder %s204, 15
      %s206 = scalar_select %p205, %s204, 15
      %p207 = scmp.lt.s32.totalorder %s20, 0
      %s208 = scalar_select %p207, %s20, 0
      %s209 = sadd.s32 %s208, %s206
      %s210 = smul.addr %s209, 4
      %s211 = scalar_lea.vmem %s1, %s210
      %p212 = pneg %p84
      %p213 = pneg %p81
      %p214 = scmp.lt.s32.totalorder %s20, 0
      %s215 = scalar_select %p214, %s20, 0
      %s216 = scalar_lea.vmem %s2, %s215
      %p217 = pneg %p110
      %p218 = pneg %p107
      %p219 = pneg %p138
      %p220 = pneg %p135
      %s221 = smul.u32 32, %s19
      %p222 = scmp.lt.s32.totalorder %s221, 63
      %s223 = scalar_select %p222, %s221, 63
      %p224 = scmp.lt.s32.totalorder %s20, 0
      %s225 = scalar_select %p224, %s20, 0
      %s226 = sadd.s32 %s225, %s223
      %s227 = smul.addr %s226, 4
      %s228 = scalar_lea.vmem %s3, %s227
      %s229 = smul.u32 32, %s19
      %p230 = scmp.lt.s32.totalorder %s229, 63
      %s231 = scalar_select %p230, %s229, 63
      %p232 = scmp.lt.s32.totalorder %s21, 0
      %s233 = scalar_select %p232, %s21, 0
      %s234 = sadd.s32 %s233, %s231
      %s235 = smul.addr %s234, 4
      %s236 = scalar_lea.vmem %s0, %s235
      %s237 = smul.u32 32, %s19
      %s238 = smul.u32 16, %s21
      %p239 = scmp.lt.s32.totalorder %s238, 15
      %s240 = scalar_select %p239, %s238, 15
      %p241 = scmp.lt.s32.totalorder %s20, 0
      %s242 = scalar_select %p241, %s20, 0
      %s243 = sadd.s32 %s242, %s240
      %s244 = smul.addr %s243, 4
      %s245 = scalar_lea.vmem %s1, %s244
      %s246 = smul.u32 16, %s21
      %p247 = scmp.lt.s32.totalorder %s20, 0
      %s248 = scalar_select %p247, %s20, 0
      %s249 = scalar_lea.vmem %s2, %s248
      %s250 = smul.u32 32, %s19
      %p251 = scmp.lt.s32.totalorder %s250, 63
      %s252 = scalar_select %p251, %s250, 63
      %p253 = scmp.lt.s32.totalorder %s20, 0
      %s254 = scalar_select %p253, %s20, 0
      %s255 = sadd.s32 %s254, %s252
      %s256 = smul.addr %s255, 4
      %s257 = scalar_lea.vmem %s3, %s256
      %s258 = smul.u32 32, %s19
      %p259 = scmp.eq.s32.totalorder %s21, 0
      // Predicated region
      $region33: #{res_bottleneck_forward.3} parent=31 // pred_check
        %p260 = pneg %p259
      $region34: #{res_bottleneck_forward.3} parent=31 // pred_check_branch
        %262 = sbr.rel (%p260) target = $region36
      $region35: #{res_bottleneck_forward.3} parent=31 // pred_region
        %263 = vst [vmem:[#allocation2] sm:$0xff] 0.0
        %264 = vst [vmem:[#allocation2 + $0x8] sm:$0xff] 0.0
        %265 = vst [vmem:[#allocation2 + $0x10] sm:$0xff] 0.0
        %266 = vst [vmem:[#allocation2 + $0x18] sm:$0xff] 0.0
        %267 = vst [vmem:[#allocation2 + $0x20] sm:$0xff] 0.0
        %268 = vst [vmem:[#allocation2 + $0x28] sm:$0xff] 0.0
        %269 = vst [vmem:[#allocation2 + $0x30] sm:$0xff] 0.0
        %270 = vst [vmem:[#allocation2 + $0x38] sm:$0xff] 0.0
        %271 = vst [vmem:[#allocation2 + $0x40] sm:$0xff] 0.0
        %272 = vst [vmem:[#allocation2 + $0x48] sm:$0xff] 0.0
        %273 = vst [vmem:[#allocation2 + $0x50] sm:$0xff] 0.0
        %274 = vst [vmem:[#allocation2 + $0x58] sm:$0xff] 0.0
        %275 = vst [vmem:[#allocation2 + $0x60] sm:$0xff] 0.0
        %276 = vst [vmem:[#allocation2 + $0x68] sm:$0xff] 0.0
        %277 = vst [vmem:[#allocation2 + $0x70] sm:$0xff] 0.0
        %278 = vst [vmem:[#allocation2 + $0x78] sm:$0xff] 0.0
        %279 = vst [vmem:[#allocation2 + $0x80] sm:$0xff] 0.0
        %280 = vst [vmem:[#allocation2 + $0x88] sm:$0xff] 0.0
        %281 = vst [vmem:[#allocation2 + $0x90] sm:$0xff] 0.0
        %282 = vst [vmem:[#allocation2 + $0x98] sm:$0xff] 0.0
        %283 = vst [vmem:[#allocation2 + $0xa0] sm:$0xff] 0.0
        %284 = vst [vmem:[#allocation2 + $0xa8] sm:$0xff] 0.0
        %285 = vst [vmem:[#allocation2 + $0xb0] sm:$0xff] 0.0
        %286 = vst [vmem:[#allocation2 + $0xb8] sm:$0xff] 0.0
        %287 = vst [vmem:[#allocation2 + $0xc0] sm:$0xff] 0.0
        %288 = vst [vmem:[#allocation2 + $0xc8] sm:$0xff] 0.0
        %289 = vst [vmem:[#allocation2 + $0xd0] sm:$0xff] 0.0
        %290 = vst [vmem:[#allocation2 + $0xd8] sm:$0xff] 0.0
        %291 = vst [vmem:[#allocation2 + $0xe0] sm:$0xff] 0.0
        %292 = vst [vmem:[#allocation2 + $0xe8] sm:$0xff] 0.0
        %293 = vst [vmem:[#allocation2 + $0xf0] sm:$0xff] 0.0
        %294 = vst [vmem:[#allocation2 + $0xf8] sm:$0xff] 0.0
      $region36: #{res_bottleneck_forward.3} parent=31 // pred_fallthru
        _
      %v295 = vld [vmem:[#allocation2] sm:$0xff]
      %v296 = vld [vmem:[#allocation2 + $0x8] sm:$0xff]
      %v297 = vld [vmem:[#allocation2 + $0x10] sm:$0xff]
      %v298 = vld [vmem:[#allocation2 + $0x18] sm:$0xff]
      %v299 = vld [vmem:[#allocation2 + $0x20] sm:$0xff]
      %v300 = vld [vmem:[#allocation2 + $0x28] sm:$0xff]
      %v301 = vld [vmem:[#allocation2 + $0x30] sm:$0xff]
      %v302 = vld [vmem:[#allocation2 + $0x38] sm:$0xff]
      %v303 = vld [vmem:[#allocation2 + $0x40] sm:$0xff]
      %v304 = vld [vmem:[#allocation2 + $0x48] sm:$0xff]
      %v305 = vld [vmem:[#allocation2 + $0x50] sm:$0xff]
      %v306 = vld [vmem:[#allocation2 + $0x58] sm:$0xff]
      %v307 = vld [vmem:[#allocation2 + $0x60] sm:$0xff]
      %v308 = vld [vmem:[#allocation2 + $0x68] sm:$0xff]
      %v309 = vld [vmem:[#allocation2 + $0x70] sm:$0xff]
      %v310 = vld [vmem:[#allocation2 + $0x78] sm:$0xff]
      %v311 = vld [vmem:[#allocation2 + $0x80] sm:$0xff]
      %v312 = vld [vmem:[#allocation2 + $0x88] sm:$0xff]
      %v313 = vld [vmem:[#allocation2 + $0x90] sm:$0xff]
      %v314 = vld [vmem:[#allocation2 + $0x98] sm:$0xff]
      %v315 = vld [vmem:[#allocation2 + $0xa0] sm:$0xff]
      %v316 = vld [vmem:[#allocation2 + $0xa8] sm:$0xff]
      %v317 = vld [vmem:[#allocation2 + $0xb0] sm:$0xff]
      %v318 = vld [vmem:[#allocation2 + $0xb8] sm:$0xff]
      %v319 = vld [vmem:[#allocation2 + $0xc0] sm:$0xff]
      %v320 = vld [vmem:[#allocation2 + $0xc8] sm:$0xff]
      %v321 = vld [vmem:[#allocation2 + $0xd0] sm:$0xff]
      %v322 = vld [vmem:[#allocation2 + $0xd8] sm:$0xff]
      %v323 = vld [vmem:[#allocation2 + $0xe0] sm:$0xff]
      %v324 = vld [vmem:[#allocation2 + $0xe8] sm:$0xff]
      %v325 = vld [vmem:[#allocation2 + $0xf0] sm:$0xff]
      %v326 = vld [vmem:[#allocation2 + $0xf8] sm:$0xff]
      %v327 = vld [vmem:[%s236] sm:$0xf]
      %v328 = vld [vmem:[%s236 + $0x4] sm:$0xf]
      %v329 = vld [vmem:[%s236 + $0x8] sm:$0xf]
      %v330 = vld [vmem:[%s236 + $0xc] sm:$0xf]
      %v331 = vld [vmem:[%s236 + $0x10] sm:$0xf]
      %v332 = vld [vmem:[%s236 + $0x14] sm:$0xf]
      %v333 = vld [vmem:[%s236 + $0x18] sm:$0xf]
      %v334 = vld [vmem:[%s236 + $0x1c] sm:$0xf]
      %v335 = vld [vmem:[%s236 + $0x20] sm:$0xf]
      %v336 = vld [vmem:[%s236 + $0x24] sm:$0xf]
      %v337 = vld [vmem:[%s236 + $0x28] sm:$0xf]
      %v338 = vld [vmem:[%s236 + $0x2c] sm:$0xf]
      %v339 = vld [vmem:[%s236 + $0x30] sm:$0xf]
      %v340 = vld [vmem:[%s236 + $0x34] sm:$0xf]
      %v341 = vld [vmem:[%s236 + $0x38] sm:$0xf]
      %v342 = vld [vmem:[%s236 + $0x3c] sm:$0xf]
      %v343 = vld [vmem:[%s236 + $0x40] sm:$0xf]
      %v344 = vld [vmem:[%s236 + $0x44] sm:$0xf]
      %v345 = vld [vmem:[%s236 + $0x48] sm:$0xf]
      %v346 = vld [vmem:[%s236 + $0x4c] sm:$0xf]
      %v347 = vld [vmem:[%s236 + $0x50] sm:$0xf]
      %v348 = vld [vmem:[%s236 + $0x54] sm:$0xf]
      %v349 = vld [vmem:[%s236 + $0x58] sm:$0xf]
      %v350 = vld [vmem:[%s236 + $0x5c] sm:$0xf]
      %v351 = vld [vmem:[%s236 + $0x60] sm:$0xf]
      %v352 = vld [vmem:[%s236 + $0x64] sm:$0xf]
      %v353 = vld [vmem:[%s236 + $0x68] sm:$0xf]
      %v354 = vld [vmem:[%s236 + $0x6c] sm:$0xf]
      %v355 = vld [vmem:[%s236 + $0x70] sm:$0xf]
      %v356 = vld [vmem:[%s236 + $0x74] sm:$0xf]
      %v357 = vld [vmem:[%s236 + $0x78] sm:$0xf]
      %v358 = vld [vmem:[%s236 + $0x7c] sm:$0xf]
      %v359 = vld [vmem:[%s245] sm:$0xf]
      %v360 = vld [vmem:[%s245 + $0x4] sm:$0xf]
      %v361 = vld [vmem:[%s245 + $0x8] sm:$0xf]
      %v362 = vld [vmem:[%s245 + $0xc] sm:$0xf]
      %v363 = vld [vmem:[%s245 + $0x10] sm:$0xf]
      %v364 = vld [vmem:[%s245 + $0x14] sm:$0xf]
      %v365 = vld [vmem:[%s245 + $0x18] sm:$0xf]
      %v366 = vld [vmem:[%s245 + $0x1c] sm:$0xf]
      %v367 = vld [vmem:[%s245 + $0x20] sm:$0xf]
      %v368 = vld [vmem:[%s245 + $0x24] sm:$0xf]
      %v369 = vld [vmem:[%s245 + $0x28] sm:$0xf]
      %v370 = vld [vmem:[%s245 + $0x2c] sm:$0xf]
      %v371 = vld [vmem:[%s245 + $0x30] sm:$0xf]
      %v372 = vld [vmem:[%s245 + $0x34] sm:$0xf]
      %v373 = vld [vmem:[%s245 + $0x38] sm:$0xf]
      %v374 = vld [vmem:[%s245 + $0x3c] sm:$0xf]
      %v407 = vunpack.c.l.b16 %v327
      %v408 = vunpack.c.l.b16 %v328
      %v409 = vunpack.c.l.b16 %v329
      %v410 = vunpack.c.l.b16 %v330
      %v411 = vunpack.c.l.b16 %v331
      %v412 = vunpack.c.l.b16 %v332
      %v413 = vunpack.c.l.b16 %v333
      %v414 = vunpack.c.l.b16 %v334
      %v415 = vunpack.c.l.b16 %v335
      %v416 = vunpack.c.l.b16 %v336
      %v417 = vunpack.c.l.b16 %v337
      %v418 = vunpack.c.l.b16 %v338
      %v419 = vunpack.c.l.b16 %v339
      %v420 = vunpack.c.l.b16 %v340
      %v421 = vunpack.c.l.b16 %v341
      %v422 = vunpack.c.l.b16 %v342
      %v423 = vunpack.c.l.b16 %v343
      %v424 = vunpack.c.l.b16 %v344
      %v425 = vunpack.c.l.b16 %v345
      %v426 = vunpack.c.l.b16 %v346
      %v427 = vunpack.c.l.b16 %v347
      %v428 = vunpack.c.l.b16 %v348
      %v429 = vunpack.c.l.b16 %v349
      %v430 = vunpack.c.l.b16 %v350
      %v431 = vunpack.c.l.b16 %v351
      %v432 = vunpack.c.l.b16 %v352
      %v433 = vunpack.c.l.b16 %v353
      %v434 = vunpack.c.l.b16 %v354
      %v435 = vunpack.c.l.b16 %v355
      %v436 = vunpack.c.l.b16 %v356
      %v437 = vunpack.c.l.b16 %v357
      %v438 = vunpack.c.l.b16 %v358
      %v439 = vpack.c.b16 %v408, %v407
      %v440 = vpack.c.b16 %v410, %v409
      %v441 = vpack.c.b16 %v412, %v411
      %v442 = vpack.c.b16 %v414, %v413
      %v443 = vpack.c.b16 %v416, %v415
      %v444 = vpack.c.b16 %v418, %v417
      %v445 = vpack.c.b16 %v420, %v419
      %v446 = vpack.c.b16 %v422, %v421
      %v447 = vpack.c.b16 %v424, %v423
      %v448 = vpack.c.b16 %v426, %v425
      %v449 = vpack.c.b16 %v428, %v427
      %v450 = vpack.c.b16 %v430, %v429
      %v451 = vpack.c.b16 %v432, %v431
      %v452 = vpack.c.b16 %v434, %v433
      %v453 = vpack.c.b16 %v436, %v435
      %v454 = vpack.c.b16 %v438, %v437
      %v487 = vunpack.c.l.b16 %v359
      %v488 = vunpack.c.l.b16 %v360
      %v489 = vunpack.c.l.b16 %v361
      %v490 = vunpack.c.l.b16 %v362
      %v491 = vunpack.c.l.b16 %v363
      %v492 = vunpack.c.l.b16 %v364
      %v493 = vunpack.c.l.b16 %v365
      %v494 = vunpack.c.l.b16 %v366
      %v495 = vunpack.c.l.b16 %v367
      %v496 = vunpack.c.l.b16 %v368
      %v497 = vunpack.c.l.b16 %v369
      %v498 = vunpack.c.l.b16 %v370
      %v499 = vunpack.c.l.b16 %v371
      %v500 = vunpack.c.l.b16 %v372
      %v501 = vunpack.c.l.b16 %v373
      %v502 = vunpack.c.l.b16 %v374
      %v503 = vpack.c.b16 %v488, %v487
      %v504 = vpack.c.b16 %v490, %v489
      %v505 = vpack.c.b16 %v492, %v491
      %v506 = vpack.c.b16 %v494, %v493
      %v507 = vpack.c.b16 %v496, %v495
      %v508 = vpack.c.b16 %v498, %v497
      %v509 = vpack.c.b16 %v500, %v499
      %v510 = vpack.c.b16 %v502, %v501
      %519 = vmatpush.bf16.msra.mxu0 %v510
      %520 = vmatpush.bf16.msra.mxu0 %v509
      %521 = vmatpush.bf16.msra.mxu0 %v508
      %522 = vmatpush.bf16.msra.mxu0 %v507
      %523 = vmatpush.bf16.msra.mxu0 %v506
      %524 = vmatpush.bf16.msra.mxu0 %v505
      %525 = vmatpush.bf16.msra.mxu0 %v504
      %526 = vmatpush.bf16.msra.mxu0 %v503
      %527 = vmatmul.bf16.gmra.mxu0 %v439
      %v528 = vpop.f32.mrf.mxu0
      %v529 = vadd.f32 0.0, %v528
      %v530 = vpop.f32.mrf.mxu0
      %v531 = vadd.f32 0.0, %v530
      %532 = vmatmul.bf16.gmra.mxu0 %v440
      %v533 = vpop.f32.mrf.mxu0
      %v534 = vadd.f32 0.0, %v533
      %v535 = vpop.f32.mrf.mxu0
      %v536 = vadd.f32 0.0, %v535
      %537 = vmatmul.bf16.gmra.mxu0 %v441
      %v538 = vpop.f32.mrf.mxu0
      %v539 = vadd.f32 0.0, %v538
      %v540 = vpop.f32.mrf.mxu0
      %v541 = vadd.f32 0.0, %v540
      %542 = vmatmul.bf16.gmra.mxu0 %v442
      %v543 = vpop.f32.mrf.mxu0
      %v544 = vadd.f32 0.0, %v543
      %v545 = vpop.f32.mrf.mxu0
      %v546 = vadd.f32 0.0, %v545
      %547 = vmatmul.bf16.gmra.mxu0 %v443
      %v548 = vpop.f32.mrf.mxu0
      %v549 = vadd.f32 0.0, %v548
      %v550 = vpop.f32.mrf.mxu0
      %v551 = vadd.f32 0.0, %v550
      %552 = vmatmul.bf16.gmra.mxu0 %v444
      %v553 = vpop.f32.mrf.mxu0
      %v554 = vadd.f32 0.0, %v553
      %v555 = vpop.f32.mrf.mxu0
      %v556 = vadd.f32 0.0, %v555
      %557 = vmatmul.bf16.gmra.mxu0 %v445
      %v558 = vpop.f32.mrf.mxu0
      %v559 = vadd.f32 0.0, %v558
      %v560 = vpop.f32.mrf.mxu0
      %v561 = vadd.f32 0.0, %v560
      %562 = vmatmul.bf16.gmra.mxu0 %v446
      %v563 = vpop.f32.mrf.mxu0
      %v564 = vadd.f32 0.0, %v563
      %v565 = vpop.f32.mrf.mxu0
      %v566 = vadd.f32 0.0, %v565
      %567 = vmatmul.bf16.gmra.mxu0 %v447
      %v568 = vpop.f32.mrf.mxu0
      %v569 = vadd.f32 0.0, %v568
      %v570 = vpop.f32.mrf.mxu0
      %v571 = vadd.f32 0.0, %v570
      %572 = vmatmul.bf16.gmra.mxu0 %v448
      %v573 = vpop.f32.mrf.mxu0
      %v574 = vadd.f32 0.0, %v573
      %v575 = vpop.f32.mrf.mxu0
      %v576 = vadd.f32 0.0, %v575
      %577 = vmatmul.bf16.gmra.mxu0 %v449
      %v578 = vpop.f32.mrf.mxu0
      %v579 = vadd.f32 0.0, %v578
      %v580 = vpop.f32.mrf.mxu0
      %v581 = vadd.f32 0.0, %v580
      %582 = vmatmul.bf16.gmra.mxu0 %v450
      %v583 = vpop.f32.mrf.mxu0
      %v584 = vadd.f32 0.0, %v583
      %v585 = vpop.f32.mrf.mxu0
      %v586 = vadd.f32 0.0, %v585
      %587 = vmatmul.bf16.gmra.mxu0 %v451
      %v588 = vpop.f32.mrf.mxu0
      %v589 = vadd.f32 0.0, %v588
      %v590 = vpop.f32.mrf.mxu0
      %v591 = vadd.f32 0.0, %v590
      %592 = vmatmul.bf16.gmra.mxu0 %v452
      %v593 = vpop.f32.mrf.mxu0
      %v594 = vadd.f32 0.0, %v593
      %v595 = vpop.f32.mrf.mxu0
      %v596 = vadd.f32 0.0, %v595
      %597 = vmatmul.bf16.gmra.mxu0 %v453
      %v598 = vpop.f32.mrf.mxu0
      %v599 = vadd.f32 0.0, %v598
      %v600 = vpop.f32.mrf.mxu0
      %v601 = vadd.f32 0.0, %v600
      %602 = vmatmul.bf16.gmra.mxu0 %v454
      %v603 = vpop.f32.mrf.mxu0
      %v604 = vadd.f32 0.0, %v603
      %v605 = vpop.f32.mrf.mxu0
      %v606 = vadd.f32 0.0, %v605
      %607 = vdwg.mxu0
      %v608 = vadd.f32 %v295, %v529
      %v609 = vadd.f32 %v296, %v531
      %v610 = vadd.f32 %v297, %v534
      %v611 = vadd.f32 %v298, %v536
      %v612 = vadd.f32 %v299, %v539
      %v613 = vadd.f32 %v300, %v541
      %v614 = vadd.f32 %v301, %v544
      %v615 = vadd.f32 %v302, %v546
      %v616 = vadd.f32 %v303, %v549
      %v617 = vadd.f32 %v304, %v551
      %v618 = vadd.f32 %v305, %v554
      %v619 = vadd.f32 %v306, %v556
      %v620 = vadd.f32 %v307, %v559
      %v621 = vadd.f32 %v308, %v561
      %v622 = vadd.f32 %v309, %v564
      %v623 = vadd.f32 %v310, %v566
      %v624 = vadd.f32 %v311, %v569
      %v625 = vadd.f32 %v312, %v571
      %v626 = vadd.f32 %v313, %v574
      %v627 = vadd.f32 %v314, %v576
      %v628 = vadd.f32 %v315, %v579
      %v629 = vadd.f32 %v316, %v581
      %v630 = vadd.f32 %v317, %v584
      %v631 = vadd.f32 %v318, %v586
      %v632 = vadd.f32 %v319, %v589
      %v633 = vadd.f32 %v320, %v591
      %v634 = vadd.f32 %v321, %v594
      %v635 = vadd.f32 %v322, %v596
      %v636 = vadd.f32 %v323, %v599
      %v637 = vadd.f32 %v324, %v601
      %v638 = vadd.f32 %v325, %v604
      %v639 = vadd.f32 %v326, %v606
      %640 = vst [vmem:[#allocation2] sm:$0xff] %v608
      %641 = vst [vmem:[#allocation2 + $0x8] sm:$0xff] %v609
      %642 = vst [vmem:[#allocation2 + $0x10] sm:$0xff] %v610
      %643 = vst [vmem:[#allocation2 + $0x18] sm:$0xff] %v611
      %644 = vst [vmem:[#allocation2 + $0x20] sm:$0xff] %v612
      %645 = vst [vmem:[#allocation2 + $0x28] sm:$0xff] %v613
      %646 = vst [vmem:[#allocation2 + $0x30] sm:$0xff] %v614
      %647 = vst [vmem:[#allocation2 + $0x38] sm:$0xff] %v615
      %648 = vst [vmem:[#allocation2 + $0x40] sm:$0xff] %v616
      %649 = vst [vmem:[#allocation2 + $0x48] sm:$0xff] %v617
      %650 = vst [vmem:[#allocation2 + $0x50] sm:$0xff] %v618
      %651 = vst [vmem:[#allocation2 + $0x58] sm:$0xff] %v619
      %652 = vst [vmem:[#allocation2 + $0x60] sm:$0xff] %v620
      %653 = vst [vmem:[#allocation2 + $0x68] sm:$0xff] %v621
      %654 = vst [vmem:[#allocation2 + $0x70] sm:$0xff] %v622
      %655 = vst [vmem:[#allocation2 + $0x78] sm:$0xff] %v623
      %656 = vst [vmem:[#allocation2 + $0x80] sm:$0xff] %v624
      %657 = vst [vmem:[#allocation2 + $0x88] sm:$0xff] %v625
      %658 = vst [vmem:[#allocation2 + $0x90] sm:$0xff] %v626
      %659 = vst [vmem:[#allocation2 + $0x98] sm:$0xff] %v627
      %660 = vst [vmem:[#allocation2 + $0xa0] sm:$0xff] %v628
      %661 = vst [vmem:[#allocation2 + $0xa8] sm:$0xff] %v629
      %662 = vst [vmem:[#allocation2 + $0xb0] sm:$0xff] %v630
      %663 = vst [vmem:[#allocation2 + $0xb8] sm:$0xff] %v631
      %664 = vst [vmem:[#allocation2 + $0xc0] sm:$0xff] %v632
      %665 = vst [vmem:[#allocation2 + $0xc8] sm:$0xff] %v633
      %666 = vst [vmem:[#allocation2 + $0xd0] sm:$0xff] %v634
      %667 = vst [vmem:[#allocation2 + $0xd8] sm:$0xff] %v635
      %668 = vst [vmem:[#allocation2 + $0xe0] sm:$0xff] %v636
      %669 = vst [vmem:[#allocation2 + $0xe8] sm:$0xff] %v637
      %670 = vst [vmem:[#allocation2 + $0xf0] sm:$0xff] %v638
      %671 = vst [vmem:[#allocation2 + $0xf8] sm:$0xff] %v639
      // Predicated region
      $region37: #{res_bottleneck_forward.3} parent=31 // pred_check
        %p672 = pneg %p259
      $region38: #{res_bottleneck_forward.3} parent=31 // pred_check_branch
        %674 = sbr.rel (%p672) target = $region40
      $region39: #{res_bottleneck_forward.3} parent=31 // pred_region
        %v675 = vld [vmem:[#allocation2] sm:$0xff]
        %v676 = vld [vmem:[#allocation2 + $0x8] sm:$0xff]
        %v677 = vld [vmem:[#allocation2 + $0x10] sm:$0xff]
        %v678 = vld [vmem:[#allocation2 + $0x18] sm:$0xff]
        %v679 = vld [vmem:[#allocation2 + $0x20] sm:$0xff]
        %v680 = vld [vmem:[#allocation2 + $0x28] sm:$0xff]
        %v681 = vld [vmem:[#allocation2 + $0x30] sm:$0xff]
        %v682 = vld [vmem:[#allocation2 + $0x38] sm:$0xff]
        %v683 = vld [vmem:[#allocation2 + $0x40] sm:$0xff]
        %v684 = vld [vmem:[#allocation2 + $0x48] sm:$0xff]
        %v685 = vld [vmem:[#allocation2 + $0x50] sm:$0xff]
        %v686 = vld [vmem:[#allocation2 + $0x58] sm:$0xff]
        %v687 = vld [vmem:[#allocation2 + $0x60] sm:$0xff]
        %v688 = vld [vmem:[#allocation2 + $0x68] sm:$0xff]
        %v689 = vld [vmem:[#allocation2 + $0x70] sm:$0xff]
        %v690 = vld [vmem:[#allocation2 + $0x78] sm:$0xff]
        %v691 = vld [vmem:[#allocation2 + $0x80] sm:$0xff]
        %v692 = vld [vmem:[#allocation2 + $0x88] sm:$0xff]
        %v693 = vld [vmem:[#allocation2 + $0x90] sm:$0xff]
        %v694 = vld [vmem:[#allocation2 + $0x98] sm:$0xff]
        %v695 = vld [vmem:[#allocation2 + $0xa0] sm:$0xff]
        %v696 = vld [vmem:[#allocation2 + $0xa8] sm:$0xff]
        %v697 = vld [vmem:[#allocation2 + $0xb0] sm:$0xff]
        %v698 = vld [vmem:[#allocation2 + $0xb8] sm:$0xff]
        %v699 = vld [vmem:[#allocation2 + $0xc0] sm:$0xff]
        %v700 = vld [vmem:[#allocation2 + $0xc8] sm:$0xff]
        %v701 = vld [vmem:[#allocation2 + $0xd0] sm:$0xff]
        %v702 = vld [vmem:[#allocation2 + $0xd8] sm:$0xff]
        %v703 = vld [vmem:[#allocation2 + $0xe0] sm:$0xff]
        %v704 = vld [vmem:[#allocation2 + $0xe8] sm:$0xff]
        %v705 = vld [vmem:[#allocation2 + $0xf0] sm:$0xff]
        %v706 = vld [vmem:[#allocation2 + $0xf8] sm:$0xff]
        %v707 = vld [vmem:[%s249] sm:$0x1]
        %v709 = vperm.slane %v707, 0
        %v711 = vadd.f32 %v675, %v709
        %v712 = vadd.f32 %v676, %v709
        %v713 = vadd.f32 %v677, %v709
        %v714 = vadd.f32 %v678, %v709
        %v715 = vadd.f32 %v679, %v709
        %v716 = vadd.f32 %v680, %v709
        %v717 = vadd.f32 %v681, %v709
        %v718 = vadd.f32 %v682, %v709
        %v719 = vadd.f32 %v683, %v709
        %v720 = vadd.f32 %v684, %v709
        %v721 = vadd.f32 %v685, %v709
        %v722 = vadd.f32 %v686, %v709
        %v723 = vadd.f32 %v687, %v709
        %v724 = vadd.f32 %v688, %v709
        %v725 = vadd.f32 %v689, %v709
        %v726 = vadd.f32 %v690, %v709
        %v727 = vadd.f32 %v691, %v709
        %v728 = vadd.f32 %v692, %v709
        %v729 = vadd.f32 %v693, %v709
        %v730 = vadd.f32 %v694, %v709
        %v731 = vadd.f32 %v695, %v709
        %v732 = vadd.f32 %v696, %v709
        %v733 = vadd.f32 %v697, %v709
        %v734 = vadd.f32 %v698, %v709
        %v735 = vadd.f32 %v699, %v709
        %v736 = vadd.f32 %v700, %v709
        %v737 = vadd.f32 %v701, %v709
        %v738 = vadd.f32 %v702, %v709
        %v739 = vadd.f32 %v703, %v709
        %v740 = vadd.f32 %v704, %v709
        %v741 = vadd.f32 %v705, %v709
        %v742 = vadd.f32 %v706, %v709
        %v743 = vmax.f32 %v711, 0.0
        %v744 = vmax.f32 %v712, 0.0
        %v745 = vmax.f32 %v713, 0.0
        %v746 = vmax.f32 %v714, 0.0
        %v747 = vmax.f32 %v715, 0.0
        %v748 = vmax.f32 %v716, 0.0
        %v749 = vmax.f32 %v717, 0.0
        %v750 = vmax.f32 %v718, 0.0
        %v751 = vmax.f32 %v719, 0.0
        %v752 = vmax.f32 %v720, 0.0
        %v753 = vmax.f32 %v721, 0.0
        %v754 = vmax.f32 %v722, 0.0
        %v755 = vmax.f32 %v723, 0.0
        %v756 = vmax.f32 %v724, 0.0
        %v757 = vmax.f32 %v725, 0.0
        %v758 = vmax.f32 %v726, 0.0
        %v759 = vmax.f32 %v727, 0.0
        %v760 = vmax.f32 %v728, 0.0
        %v761 = vmax.f32 %v729, 0.0
        %v762 = vmax.f32 %v730, 0.0
        %v763 = vmax.f32 %v731, 0.0
        %v764 = vmax.f32 %v732, 0.0
        %v765 = vmax.f32 %v733, 0.0
        %v766 = vmax.f32 %v734, 0.0
        %v767 = vmax.f32 %v735, 0.0
        %v768 = vmax.f32 %v736, 0.0
        %v769 = vmax.f32 %v737, 0.0
        %v770 = vmax.f32 %v738, 0.0
        %v771 = vmax.f32 %v739, 0.0
        %v772 = vmax.f32 %v740, 0.0
        %v773 = vmax.f32 %v741, 0.0
        %v774 = vmax.f32 %v742, 0.0
        %v775 = vpack.c.bf16 %v743, %v743
        %v776 = vpack.c.bf16 %v744, %v744
        %v777 = vpack.c.bf16 %v745, %v745
        %v778 = vpack.c.bf16 %v746, %v746
        %v779 = vpack.c.bf16 %v747, %v747
        %v780 = vpack.c.bf16 %v748, %v748
        %v781 = vpack.c.bf16 %v749, %v749
        %v782 = vpack.c.bf16 %v750, %v750
        %v783 = vpack.c.bf16 %v751, %v751
        %v784 = vpack.c.bf16 %v752, %v752
        %v785 = vpack.c.bf16 %v753, %v753
        %v786 = vpack.c.bf16 %v754, %v754
        %v787 = vpack.c.bf16 %v755, %v755
        %v788 = vpack.c.bf16 %v756, %v756
        %v789 = vpack.c.bf16 %v757, %v757
        %v790 = vpack.c.bf16 %v758, %v758
        %v791 = vpack.c.bf16 %v759, %v759
        %v792 = vpack.c.bf16 %v760, %v760
        %v793 = vpack.c.bf16 %v761, %v761
        %v794 = vpack.c.bf16 %v762, %v762
        %v795 = vpack.c.bf16 %v763, %v763
        %v796 = vpack.c.bf16 %v764, %v764
        %v797 = vpack.c.bf16 %v765, %v765
        %v798 = vpack.c.bf16 %v766, %v766
        %v799 = vpack.c.bf16 %v767, %v767
        %v800 = vpack.c.bf16 %v768, %v768
        %v801 = vpack.c.bf16 %v769, %v769
        %v802 = vpack.c.bf16 %v770, %v770
        %v803 = vpack.c.bf16 %v771, %v771
        %v804 = vpack.c.bf16 %v772, %v772
        %v805 = vpack.c.bf16 %v773, %v773
        %v806 = vpack.c.bf16 %v774, %v774
        %807 = vst [vmem:[%s257] sm:$0xf] %v775
        %808 = vst [vmem:[%s257 + $0x4] sm:$0xf] %v776
        %809 = vst [vmem:[%s257 + $0x8] sm:$0xf] %v777
        %810 = vst [vmem:[%s257 + $0xc] sm:$0xf] %v778
        %811 = vst [vmem:[%s257 + $0x10] sm:$0xf] %v779
        %812 = vst [vmem:[%s257 + $0x14] sm:$0xf] %v780
        %813 = vst [vmem:[%s257 + $0x18] sm:$0xf] %v781
        %814 = vst [vmem:[%s257 + $0x1c] sm:$0xf] %v782
        %815 = vst [vmem:[%s257 + $0x20] sm:$0xf] %v783
        %816 = vst [vmem:[%s257 + $0x24] sm:$0xf] %v784
        %817 = vst [vmem:[%s257 + $0x28] sm:$0xf] %v785
        %818 = vst [vmem:[%s257 + $0x2c] sm:$0xf] %v786
        %819 = vst [vmem:[%s257 + $0x30] sm:$0xf] %v787
        %820 = vst [vmem:[%s257 + $0x34] sm:$0xf] %v788
        %821 = vst [vmem:[%s257 + $0x38] sm:$0xf] %v789
        %822 = vst [vmem:[%s257 + $0x3c] sm:$0xf] %v790
        %823 = vst [vmem:[%s257 + $0x40] sm:$0xf] %v791
        %824 = vst [vmem:[%s257 + $0x44] sm:$0xf] %v792
        %825 = vst [vmem:[%s257 + $0x48] sm:$0xf] %v793
        %826 = vst [vmem:[%s257 + $0x4c] sm:$0xf] %v794
        %827 = vst [vmem:[%s257 + $0x50] sm:$0xf] %v795
        %828 = vst [vmem:[%s257 + $0x54] sm:$0xf] %v796
        %829 = vst [vmem:[%s257 + $0x58] sm:$0xf] %v797
        %830 = vst [vmem:[%s257 + $0x5c] sm:$0xf] %v798
        %831 = vst [vmem:[%s257 + $0x60] sm:$0xf] %v799
        %832 = vst [vmem:[%s257 + $0x64] sm:$0xf] %v800
        %833 = vst [vmem:[%s257 + $0x68] sm:$0xf] %v801
        %834 = vst [vmem:[%s257 + $0x6c] sm:$0xf] %v802
        %835 = vst [vmem:[%s257 + $0x70] sm:$0xf] %v803
        %836 = vst [vmem:[%s257 + $0x74] sm:$0xf] %v804
        %837 = vst [vmem:[%s257 + $0x78] sm:$0xf] %v805
        %838 = vst [vmem:[%s257 + $0x7c] sm:$0xf] %v806
      $region40: #{res_bottleneck_forward.3} parent=31 // pred_fallthru
        _
      %s839 = smul.u32 32, %s19
      %p840 = scmp.lt.s32.totalorder %s839, 63
      %s841 = scalar_select %p840, %s839, 63
      %p842 = scmp.lt.s32.totalorder %s20, 0
      %s843 = scalar_select %p842, %s20, 0
      %s844 = sadd.s32 %s843, %s841
      %s845 = smul.addr %s844, 4
      %s846 = scalar_lea.vmem %s3, %s845
      // Predicated region
      $region41: #{res_bottleneck_forward.3} parent=31 // pred_check
        %p847 = pneg %p135
      $region42: #{res_bottleneck_forward.3} parent=31 // pred_check_branch
        %849 = sbr.rel (%p847) target = $region44
      $region43: #{res_bottleneck_forward.3} parent=31 // pred_region
        %s850 = smul.u32 32, %s19
      $region44: #{res_bottleneck_forward.3} parent=31 // pred_fallthru
        _
    $region32: #{res_bottleneck_forward.3} parent=5 // pred_fallthru
      _
    %p851 = scmp.le.s32.totalorder 2, %s9
    // Predicated region
    $region45: #{res_bottleneck_forward.3} parent=5 // pred_check
      %p852 = pneg %p851
    $region46: #{res_bottleneck_forward.3} parent=5 // pred_check_branch
      %854 = sbr.rel (%p852) target = $region48
    $region47: #{res_bottleneck_forward.3} parent=5 // pred_region
      %s855 = ssub.s32 %s9, 2
      // Predicated region
      $region49: #{res_bottleneck_forward.3} parent=47 // pred_check
        %p856 = pneg %p141
      $region50: #{res_bottleneck_forward.3} parent=47 // pred_check_branch
        %858 = sbr.rel (%p856) target = $region52
      $region51: #{res_bottleneck_forward.3} parent=47 // pred_region
        %s859 = smul.u32 32, %s22
        %p860 = scmp.lt.s32.totalorder %s859, 63
        %s861 = scalar_select %p860, %s859, 63
        %p862 = scmp.lt.s32.totalorder %s23, 0
        %s863 = scalar_select %p862, %s23, 0
        %s864 = sadd.s32 %s863, %s861
        %s865 = smul.addr %s864, 4
        %s866 = scalar_lea.vmem %s3, %s865
      $region52: #{res_bottleneck_forward.3} parent=47 // pred_fallthru
        _
    $region48: #{res_bottleneck_forward.3} parent=5 // pred_fallthru
      _
  $region6: #{res_bottleneck_forward.3} parent=0 // loop_footer
    %s13 = sadd.s32 1, %s9
  $region7: #{res_bottleneck_forward.3} parent=0 // loop_footer_branch
    %8 = sbr.rel target = $region3
  $region8: #{res_bottleneck_forward.3} parent=0 // loop_exit
    _

// kernel: res_bottleneck_forward.4
$region0: #{res_bottleneck_forward.4}
  #allocation0 [shape = 'u32[]', space=smem, size = 0x4, offset = 0x4, fixed_abs, tag = 'smem constant byte address 0x4 - core index']
  #allocation1 [shape = 'u32[72,128]{1,0:T(1,128)}', space=vmem, size = 0x9000, scoped, tag = 'internal scratch']
  #allocation2 [shape = 'f32[128,128]{1,0:T(8,128)}', space=vmem, size = 0x10000, scoped, tag = 'scratch operand']
  %s0 = inlined_call_operand.vmem [shape: bf16[128,256], index: 0, kind: input, shape index: {}]
  %s1 = inlined_call_operand.vmem [shape: bf16[256,128], index: 1, kind: input, shape index: {}]
  %s2 = inlined_call_operand.vmem [shape: f32[1,128], index: 2, kind: input, shape index: {}]
  %s3 = inlined_call_operand.vmem [shape: bf16[128,128], index: 3, kind: output, shape index: {}]
  %s4 = sld [smem:[#allocation0]]
  $region30: #{res_bottleneck_forward.4} parent=0
    _
  %s6 = ssub.s32 1, %s4
  %s7 = scalar_select 0, %s6, %s4
  // Predicated region
  $region2: #{res_bottleneck_forward.4} parent=0 // pred_check
    _
  $region3: #{res_bottleneck_forward.4} parent=0 // pred_check_branch
    %9 = sbr.rel (0) target = $region5
  $region4: #{res_bottleneck_forward.4} parent=0 // pred_region
    _
  $region5: #{res_bottleneck_forward.4} parent=0 // pred_fallthru
    _
  // Predicated region
  $region6: #{res_bottleneck_forward.4} parent=0 // pred_check
    _
  $region7: #{res_bottleneck_forward.4} parent=0 // pred_check_branch
    %11 = sbr.rel (0) target = $region9
  $region8: #{res_bottleneck_forward.4} parent=0 // pred_region
    _
  $region9: #{res_bottleneck_forward.4} parent=0 // pred_fallthru
    _
  // Predicated region
  $region10: #{res_bottleneck_forward.4} parent=0 // pred_check
    _
  $region11: #{res_bottleneck_forward.4} parent=0 // pred_check_branch
    %13 = sbr.rel (0) target = $region13
  $region12: #{res_bottleneck_forward.4} parent=0 // pred_region
    _
  $region13: #{res_bottleneck_forward.4} parent=0 // pred_fallthru
    _
  %p14 = scmp.eq.s32.totalorder 0, 0
  // Predicated region
  $region14: #{res_bottleneck_forward.4} parent=0 // pred_check
    %p15 = pneg %p14
  $region15: #{res_bottleneck_forward.4} parent=0 // pred_check_branch
    %17 = sbr.rel (%p15) target = $region17
  $region16: #{res_bottleneck_forward.4} parent=0 // pred_region
    %18 = vst [vmem:[#allocation2] sm:$0xff] 0.0
    %19 = vst [vmem:[#allocation2 + $0x8] sm:$0xff] 0.0
    %20 = vst [vmem:[#allocation2 + $0x10] sm:$0xff] 0.0
    %21 = vst [vmem:[#allocation2 + $0x18] sm:$0xff] 0.0
    %22 = vst [vmem:[#allocation2 + $0x20] sm:$0xff] 0.0
    %23 = vst [vmem:[#allocation2 + $0x28] sm:$0xff] 0.0
    %24 = vst [vmem:[#allocation2 + $0x30] sm:$0xff] 0.0
    %25 = vst [vmem:[#allocation2 + $0x38] sm:$0xff] 0.0
    %26 = vst [vmem:[#allocation2 + $0x40] sm:$0xff] 0.0
    %27 = vst [vmem:[#allocation2 + $0x48] sm:$0xff] 0.0
    %28 = vst [vmem:[#allocation2 + $0x50] sm:$0xff] 0.0
    %29 = vst [vmem:[#allocation2 + $0x58] sm:$0xff] 0.0
    %30 = vst [vmem:[#allocation2 + $0x60] sm:$0xff] 0.0
    %31 = vst [vmem:[#allocation2 + $0x68] sm:$0xff] 0.0
    %32 = vst [vmem:[#allocation2 + $0x70] sm:$0xff] 0.0
    %33 = vst [vmem:[#allocation2 + $0x78] sm:$0xff] 0.0
  $region17: #{res_bottleneck_forward.4} parent=0 // pred_fallthru
    _
  %v34 = vld [vmem:[#allocation2] sm:$0xff]
  %v35 = vld [vmem:[#allocation2 + $0x8] sm:$0xff]
  %v36 = vld [vmem:[#allocation2 + $0x10] sm:$0xff]
  %v37 = vld [vmem:[#allocation2 + $0x18] sm:$0xff]
  %v38 = vld [vmem:[#allocation2 + $0x20] sm:$0xff]
  %v39 = vld [vmem:[#allocation2 + $0x28] sm:$0xff]
  %v40 = vld [vmem:[#allocation2 + $0x30] sm:$0xff]
  %v41 = vld [vmem:[#allocation2 + $0x38] sm:$0xff]
  %v42 = vld [vmem:[#allocation2 + $0x40] sm:$0xff]
  %v43 = vld [vmem:[#allocation2 + $0x48] sm:$0xff]
  %v44 = vld [vmem:[#allocation2 + $0x50] sm:$0xff]
  %v45 = vld [vmem:[#allocation2 + $0x58] sm:$0xff]
  %v46 = vld [vmem:[#allocation2 + $0x60] sm:$0xff]
  %v47 = vld [vmem:[#allocation2 + $0x68] sm:$0xff]
  %v48 = vld [vmem:[#allocation2 + $0x70] sm:$0xff]
  %v49 = vld [vmem:[#allocation2 + $0x78] sm:$0xff]
  %v50 = vld [vmem:[%s0] sm:$0xff]
  %v51 = vld [vmem:[%s0 + $0x8] sm:$0xff]
  %v52 = vld [vmem:[%s0 + $0x10] sm:$0xff]
  %v53 = vld [vmem:[%s0 + $0x18] sm:$0xff]
  %v54 = vld [vmem:[%s0 + $0x20] sm:$0xff]
  %v55 = vld [vmem:[%s0 + $0x28] sm:$0xff]
  %v56 = vld [vmem:[%s0 + $0x30] sm:$0xff]
  %v57 = vld [vmem:[%s0 + $0x38] sm:$0xff]
  %v58 = vld [vmem:[%s0 + $0x40] sm:$0xff]
  %v59 = vld [vmem:[%s0 + $0x48] sm:$0xff]
  %v60 = vld [vmem:[%s0 + $0x50] sm:$0xff]
  %v61 = vld [vmem:[%s0 + $0x58] sm:$0xff]
  %v62 = vld [vmem:[%s0 + $0x60] sm:$0xff]
  %v63 = vld [vmem:[%s0 + $0x68] sm:$0xff]
  %v64 = vld [vmem:[%s0 + $0x70] sm:$0xff]
  %v65 = vld [vmem:[%s0 + $0x78] sm:$0xff]
  %v66 = vld [vmem:[%s1] sm:$0xf]
  %v67 = vld [vmem:[%s1 + $0x4] sm:$0xf]
  %v68 = vld [vmem:[%s1 + $0x8] sm:$0xf]
  %v69 = vld [vmem:[%s1 + $0xc] sm:$0xf]
  %v70 = vld [vmem:[%s1 + $0x10] sm:$0xf]
  %v71 = vld [vmem:[%s1 + $0x14] sm:$0xf]
  %v72 = vld [vmem:[%s1 + $0x18] sm:$0xf]
  %v73 = vld [vmem:[%s1 + $0x1c] sm:$0xf]
  %v74 = vld [vmem:[%s1 + $0x20] sm:$0xf]
  %v75 = vld [vmem:[%s1 + $0x24] sm:$0xf]
  %v76 = vld [vmem:[%s1 + $0x28] sm:$0xf]
  %v77 = vld [vmem:[%s1 + $0x2c] sm:$0xf]
  %v78 = vld [vmem:[%s1 + $0x30] sm:$0xf]
  %v79 = vld [vmem:[%s1 + $0x34] sm:$0xf]
  %v80 = vld [vmem:[%s1 + $0x38] sm:$0xf]
  %v81 = vld [vmem:[%s1 + $0x3c] sm:$0xf]
  %v82 = vld [vmem:[%s1 + $0x40] sm:$0xf]
  %v83 = vld [vmem:[%s1 + $0x44] sm:$0xf]
  %v84 = vld [vmem:[%s1 + $0x48] sm:$0xf]
  %v85 = vld [vmem:[%s1 + $0x4c] sm:$0xf]
  %v86 = vld [vmem:[%s1 + $0x50] sm:$0xf]
  %v87 = vld [vmem:[%s1 + $0x54] sm:$0xf]
  %v88 = vld [vmem:[%s1 + $0x58] sm:$0xf]
  %v89 = vld [vmem:[%s1 + $0x5c] sm:$0xf]
  %v90 = vld [vmem:[%s1 + $0x60] sm:$0xf]
  %v91 = vld [vmem:[%s1 + $0x64] sm:$0xf]
  %v92 = vld [vmem:[%s1 + $0x68] sm:$0xf]
  %v93 = vld [vmem:[%s1 + $0x6c] sm:$0xf]
  %v94 = vld [vmem:[%s1 + $0x70] sm:$0xf]
  %v95 = vld [vmem:[%s1 + $0x74] sm:$0xf]
  %v96 = vld [vmem:[%s1 + $0x78] sm:$0xf]
  %v97 = vld [vmem:[%s1 + $0x7c] sm:$0xf]
  %v114 = vunpack.c.l.b16 %v50
  %v115 = vunpack.c.h.b16 %v50
  %v116 = vunpack.c.l.b16 %v51
  %v117 = vunpack.c.h.b16 %v51
  %v118 = vunpack.c.l.b16 %v52
  %v119 = vunpack.c.h.b16 %v52
  %v120 = vunpack.c.l.b16 %v53
  %v121 = vunpack.c.h.b16 %v53
  %v122 = vunpack.c.l.b16 %v54
  %v123 = vunpack.c.h.b16 %v54
  %v124 = vunpack.c.l.b16 %v55
  %v125 = vunpack.c.h.b16 %v55
  %v126 = vunpack.c.l.b16 %v56
  %v127 = vunpack.c.h.b16 %v56
  %v128 = vunpack.c.l.b16 %v57
  %v129 = vunpack.c.h.b16 %v57
  %v130 = vunpack.c.l.b16 %v58
  %v131 = vunpack.c.h.b16 %v58
  %v132 = vunpack.c.l.b16 %v59
  %v133 = vunpack.c.h.b16 %v59
  %v134 = vunpack.c.l.b16 %v60
  %v135 = vunpack.c.h.b16 %v60
  %v136 = vunpack.c.l.b16 %v61
  %v137 = vunpack.c.h.b16 %v61
  %v138 = vunpack.c.l.b16 %v62
  %v139 = vunpack.c.h.b16 %v62
  %v140 = vunpack.c.l.b16 %v63
  %v141 = vunpack.c.h.b16 %v63
  %v142 = vunpack.c.l.b16 %v64
  %v143 = vunpack.c.h.b16 %v64
  %v144 = vunpack.c.l.b16 %v65
  %v145 = vunpack.c.h.b16 %v65
  %v146 = vpack.c.b16 %v116, %v114
  %v147 = vpack.c.b16 %v117, %v115
  %v148 = vpack.c.b16 %v120, %v118
  %v149 = vpack.c.b16 %v121, %v119
  %v150 = vpack.c.b16 %v124, %v122
  %v151 = vpack.c.b16 %v125, %v123
  %v152 = vpack.c.b16 %v128, %v126
  %v153 = vpack.c.b16 %v129, %v127
  %v154 = vpack.c.b16 %v132, %v130
  %v155 = vpack.c.b16 %v133, %v131
  %v156 = vpack.c.b16 %v136, %v134
  %v157 = vpack.c.b16 %v137, %v135
  %v158 = vpack.c.b16 %v140, %v138
  %v159 = vpack.c.b16 %v141, %v139
  %v160 = vpack.c.b16 %v144, %v142
  %v161 = vpack.c.b16 %v145, %v143
  %v210 = vunpack.c.l.b16 %v66
  %v211 = vunpack.c.l.b16 %v67
  %v212 = vunpack.c.l.b16 %v68
  %v213 = vunpack.c.l.b16 %v69
  %v214 = vunpack.c.l.b16 %v70
  %v215 = vunpack.c.l.b16 %v71
  %v216 = vunpack.c.l.b16 %v72
  %v217 = vunpack.c.l.b16 %v73
  %v218 = vunpack.c.l.b16 %v74
  %v219 = vunpack.c.l.b16 %v75
  %v220 = vunpack.c.l.b16 %v76
  %v221 = vunpack.c.l.b16 %v77
  %v222 = vunpack.c.l.b16 %v78
  %v223 = vunpack.c.l.b16 %v79
  %v224 = vunpack.c.l.b16 %v80
  %v225 = vunpack.c.l.b16 %v81
  %v226 = vunpack.c.l.b16 %v82
  %v227 = vunpack.c.l.b16 %v83
  %v228 = vunpack.c.l.b16 %v84
  %v229 = vunpack.c.l.b16 %v85
  %v230 = vunpack.c.l.b16 %v86
  %v231 = vunpack.c.l.b16 %v87
  %v232 = vunpack.c.l.b16 %v88
  %v233 = vunpack.c.l.b16 %v89
  %v234 = vunpack.c.l.b16 %v90
  %v235 = vunpack.c.l.b16 %v91
  %v236 = vunpack.c.l.b16 %v92
  %v237 = vunpack.c.l.b16 %v93
  %v238 = vunpack.c.l.b16 %v94
  %v239 = vunpack.c.l.b16 %v95
  %v240 = vunpack.c.l.b16 %v96
  %v241 = vunpack.c.l.b16 %v97
  %v242 = vpack.c.b16 %v211, %v210
  %v243 = vpack.c.b16 %v213, %v212
  %v244 = vpack.c.b16 %v215, %v214
  %v245 = vpack.c.b16 %v217, %v216
  %v246 = vpack.c.b16 %v219, %v218
  %v247 = vpack.c.b16 %v221, %v220
  %v248 = vpack.c.b16 %v223, %v222
  %v249 = vpack.c.b16 %v225, %v224
  %v250 = vpack.c.b16 %v227, %v226
  %v251 = vpack.c.b16 %v229, %v228
  %v252 = vpack.c.b16 %v231, %v230
  %v253 = vpack.c.b16 %v233, %v232
  %v254 = vpack.c.b16 %v235, %v234
  %v255 = vpack.c.b16 %v237, %v236
  %v256 = vpack.c.b16 %v239, %v238
  %v257 = vpack.c.b16 %v241, %v240
  %274 = vmatpush.bf16.msra.mxu0 %v249
  %275 = vmatpush.bf16.msra.mxu0 %v248
  %276 = vmatpush.bf16.msra.mxu0 %v247
  %277 = vmatpush.bf16.msra.mxu0 %v246
  %278 = vmatpush.bf16.msra.mxu0 %v245
  %279 = vmatpush.bf16.msra.mxu0 %v244
  %280 = vmatpush.bf16.msra.mxu0 %v243
  %281 = vmatpush.bf16.msra.mxu0 %v242
  %282 = vmatmul.bf16.gmra.mxu0 %v146
  %v283 = vpop.f32.mrf.mxu0
  %v284 = vadd.f32 0.0, %v283
  %v285 = vpop.f32.mrf.mxu0
  %v286 = vadd.f32 0.0, %v285
  %287 = vmatmul.bf16.gmra.mxu0 %v148
  %v288 = vpop.f32.mrf.mxu0
  %v289 = vadd.f32 0.0, %v288
  %v290 = vpop.f32.mrf.mxu0
  %v291 = vadd.f32 0.0, %v290
  %292 = vmatmul.bf16.gmra.mxu0 %v150
  %v293 = vpop.f32.mrf.mxu0
  %v294 = vadd.f32 0.0, %v293
  %v295 = vpop.f32.mrf.mxu0
  %v296 = vadd.f32 0.0, %v295
  %297 = vmatmul.bf16.gmra.mxu0 %v152
  %v298 = vpop.f32.mrf.mxu0
  %v299 = vadd.f32 0.0, %v298
  %v300 = vpop.f32.mrf.mxu0
  %v301 = vadd.f32 0.0, %v300
  %302 = vmatmul.bf16.gmra.mxu0 %v154
  %v303 = vpop.f32.mrf.mxu0
  %v304 = vadd.f32 0.0, %v303
  %v305 = vpop.f32.mrf.mxu0
  %v306 = vadd.f32 0.0, %v305
  %307 = vmatmul.bf16.gmra.mxu0 %v156
  %v308 = vpop.f32.mrf.mxu0
  %v309 = vadd.f32 0.0, %v308
  %v310 = vpop.f32.mrf.mxu0
  %v311 = vadd.f32 0.0, %v310
  %312 = vmatmul.bf16.gmra.mxu0 %v158
  %v313 = vpop.f32.mrf.mxu0
  %v314 = vadd.f32 0.0, %v313
  %v315 = vpop.f32.mrf.mxu0
  %v316 = vadd.f32 0.0, %v315
  %317 = vmatmul.bf16.gmra.mxu0 %v160
  %v318 = vpop.f32.mrf.mxu0
  %v319 = vadd.f32 0.0, %v318
  %v320 = vpop.f32.mrf.mxu0
  %v321 = vadd.f32 0.0, %v320
  %322 = vdwg.mxu0
  %323 = vmatpush.bf16.msra.mxu0 %v257
  %324 = vmatpush.bf16.msra.mxu0 %v256
  %325 = vmatpush.bf16.msra.mxu0 %v255
  %326 = vmatpush.bf16.msra.mxu0 %v254
  %327 = vmatpush.bf16.msra.mxu0 %v253
  %328 = vmatpush.bf16.msra.mxu0 %v252
  %329 = vmatpush.bf16.msra.mxu0 %v251
  %330 = vmatpush.bf16.msra.mxu0 %v250
  %331 = vmatmul.bf16.gmra.mxu0 %v147
  %v332 = vpop.f32.mrf.mxu0
  %v333 = vadd.f32 %v284, %v332
  %v334 = vpop.f32.mrf.mxu0
  %v335 = vadd.f32 %v286, %v334
  %336 = vmatmul.bf16.gmra.mxu0 %v149
  %v337 = vpop.f32.mrf.mxu0
  %v338 = vadd.f32 %v289, %v337
  %v339 = vpop.f32.mrf.mxu0
  %v340 = vadd.f32 %v291, %v339
  %341 = vmatmul.bf16.gmra.mxu0 %v151
  %v342 = vpop.f32.mrf.mxu0
  %v343 = vadd.f32 %v294, %v342
  %v344 = vpop.f32.mrf.mxu0
  %v345 = vadd.f32 %v296, %v344
  %346 = vmatmul.bf16.gmra.mxu0 %v153
  %v347 = vpop.f32.mrf.mxu0
  %v348 = vadd.f32 %v299, %v347
  %v349 = vpop.f32.mrf.mxu0
  %v350 = vadd.f32 %v301, %v349
  %351 = vmatmul.bf16.gmra.mxu0 %v155
  %v352 = vpop.f32.mrf.mxu0
  %v353 = vadd.f32 %v304, %v352
  %v354 = vpop.f32.mrf.mxu0
  %v355 = vadd.f32 %v306, %v354
  %356 = vmatmul.bf16.gmra.mxu0 %v157
  %v357 = vpop.f32.mrf.mxu0
  %v358 = vadd.f32 %v309, %v357
  %v359 = vpop.f32.mrf.mxu0
  %v360 = vadd.f32 %v311, %v359
  %361 = vmatmul.bf16.gmra.mxu0 %v159
  %v362 = vpop.f32.mrf.mxu0
  %v363 = vadd.f32 %v314, %v362
  %v364 = vpop.f32.mrf.mxu0
  %v365 = vadd.f32 %v316, %v364
  %366 = vmatmul.bf16.gmra.mxu0 %v161
  %v367 = vpop.f32.mrf.mxu0
  %v368 = vadd.f32 %v319, %v367
  %v369 = vpop.f32.mrf.mxu0
  %v370 = vadd.f32 %v321, %v369
  %371 = vdwg.mxu0
  %v372 = vadd.f32 %v34, %v333
  %v373 = vadd.f32 %v35, %v335
  %v374 = vadd.f32 %v36, %v338
  %v375 = vadd.f32 %v37, %v340
  %v376 = vadd.f32 %v38, %v343
  %v377 = vadd.f32 %v39, %v345
  %v378 = vadd.f32 %v40, %v348
  %v379 = vadd.f32 %v41, %v350
  %v380 = vadd.f32 %v42, %v353
  %v381 = vadd.f32 %v43, %v355
  %v382 = vadd.f32 %v44, %v358
  %v383 = vadd.f32 %v45, %v360
  %v384 = vadd.f32 %v46, %v363
  %v385 = vadd.f32 %v47, %v365
  %v386 = vadd.f32 %v48, %v368
  %v387 = vadd.f32 %v49, %v370
  %388 = vst [vmem:[#allocation2] sm:$0xff] %v372
  %389 = vst [vmem:[#allocation2 + $0x8] sm:$0xff] %v373
  %390 = vst [vmem:[#allocation2 + $0x10] sm:$0xff] %v374
  %391 = vst [vmem:[#allocation2 + $0x18] sm:$0xff] %v375
  %392 = vst [vmem:[#allocation2 + $0x20] sm:$0xff] %v376
  %393 = vst [vmem:[#allocation2 + $0x28] sm:$0xff] %v377
  %394 = vst [vmem:[#allocation2 + $0x30] sm:$0xff] %v378
  %395 = vst [vmem:[#allocation2 + $0x38] sm:$0xff] %v379
  %396 = vst [vmem:[#allocation2 + $0x40] sm:$0xff] %v380
  %397 = vst [vmem:[#allocation2 + $0x48] sm:$0xff] %v381
  %398 = vst [vmem:[#allocation2 + $0x50] sm:$0xff] %v382
  %399 = vst [vmem:[#allocation2 + $0x58] sm:$0xff] %v383
  %400 = vst [vmem:[#allocation2 + $0x60] sm:$0xff] %v384
  %401 = vst [vmem:[#allocation2 + $0x68] sm:$0xff] %v385
  %402 = vst [vmem:[#allocation2 + $0x70] sm:$0xff] %v386
  %403 = vst [vmem:[#allocation2 + $0x78] sm:$0xff] %v387
  // Predicated region
  $region18: #{res_bottleneck_forward.4} parent=0 // pred_check
    %p404 = pneg %p14
  $region19: #{res_bottleneck_forward.4} parent=0 // pred_check_branch
    %406 = sbr.rel (%p404) target = $region21
  $region20: #{res_bottleneck_forward.4} parent=0 // pred_region
    %v407 = vld [vmem:[#allocation2] sm:$0xff]
    %v408 = vld [vmem:[#allocation2 + $0x8] sm:$0xff]
    %v409 = vld [vmem:[#allocation2 + $0x10] sm:$0xff]
    %v410 = vld [vmem:[#allocation2 + $0x18] sm:$0xff]
    %v411 = vld [vmem:[#allocation2 + $0x20] sm:$0xff]
    %v412 = vld [vmem:[#allocation2 + $0x28] sm:$0xff]
    %v413 = vld [vmem:[#allocation2 + $0x30] sm:$0xff]
    %v414 = vld [vmem:[#allocation2 + $0x38] sm:$0xff]
    %v415 = vld [vmem:[#allocation2 + $0x40] sm:$0xff]
    %v416 = vld [vmem:[#allocation2 + $0x48] sm:$0xff]
    %v417 = vld [vmem:[#allocation2 + $0x50] sm:$0xff]
    %v418 = vld [vmem:[#allocation2 + $0x58] sm:$0xff]
    %v419 = vld [vmem:[#allocation2 + $0x60] sm:$0xff]
    %v420 = vld [vmem:[#allocation2 + $0x68] sm:$0xff]
    %v421 = vld [vmem:[#allocation2 + $0x70] sm:$0xff]
    %v422 = vld [vmem:[#allocation2 + $0x78] sm:$0xff]
    %v423 = vld [vmem:[%s2] sm:$0x1]
    %v425 = vperm.slane %v423, 0
    %v427 = vadd.f32 %v407, %v425
    %v428 = vadd.f32 %v408, %v425
    %v429 = vadd.f32 %v409, %v425
    %v430 = vadd.f32 %v410, %v425
    %v431 = vadd.f32 %v411, %v425
    %v432 = vadd.f32 %v412, %v425
    %v433 = vadd.f32 %v413, %v425
    %v434 = vadd.f32 %v414, %v425
    %v435 = vadd.f32 %v415, %v425
    %v436 = vadd.f32 %v416, %v425
    %v437 = vadd.f32 %v417, %v425
    %v438 = vadd.f32 %v418, %v425
    %v439 = vadd.f32 %v419, %v425
    %v440 = vadd.f32 %v420, %v425
    %v441 = vadd.f32 %v421, %v425
    %v442 = vadd.f32 %v422, %v425
    %v443 = vmax.f32 %v427, 0.0
    %v444 = vmax.f32 %v428, 0.0
    %v445 = vmax.f32 %v429, 0.0
    %v446 = vmax.f32 %v430, 0.0
    %v447 = vmax.f32 %v431, 0.0
    %v448 = vmax.f32 %v432, 0.0
    %v449 = vmax.f32 %v433, 0.0
    %v450 = vmax.f32 %v434, 0.0
    %v451 = vmax.f32 %v435, 0.0
    %v452 = vmax.f32 %v436, 0.0
    %v453 = vmax.f32 %v437, 0.0
    %v454 = vmax.f32 %v438, 0.0
    %v455 = vmax.f32 %v439, 0.0
    %v456 = vmax.f32 %v440, 0.0
    %v457 = vmax.f32 %v441, 0.0
    %v458 = vmax.f32 %v442, 0.0
    %v459 = vpack.c.bf16 %v443, %v443
    %v460 = vpack.c.bf16 %v444, %v444
    %v461 = vpack.c.bf16 %v445, %v445
    %v462 = vpack.c.bf16 %v446, %v446
    %v463 = vpack.c.bf16 %v447, %v447
    %v464 = vpack.c.bf16 %v448, %v448
    %v465 = vpack.c.bf16 %v449, %v449
    %v466 = vpack.c.bf16 %v450, %v450
    %v467 = vpack.c.bf16 %v451, %v451
    %v468 = vpack.c.bf16 %v452, %v452
    %v469 = vpack.c.bf16 %v453, %v453
    %v470 = vpack.c.bf16 %v454, %v454
    %v471 = vpack.c.bf16 %v455, %v455
    %v472 = vpack.c.bf16 %v456, %v456
    %v473 = vpack.c.bf16 %v457, %v457
    %v474 = vpack.c.bf16 %v458, %v458
    %475 = vst [vmem:[%s3] sm:$0xf] %v459
    %476 = vst [vmem:[%s3 + $0x4] sm:$0xf] %v460
    %477 = vst [vmem:[%s3 + $0x8] sm:$0xf] %v461
    %478 = vst [vmem:[%s3 + $0xc] sm:$0xf] %v462
    %479 = vst [vmem:[%s3 + $0x10] sm:$0xf] %v463
    %480 = vst [vmem:[%s3 + $0x14] sm:$0xf] %v464
    %481 = vst [vmem:[%s3 + $0x18] sm:$0xf] %v465
    %482 = vst [vmem:[%s3 + $0x1c] sm:$0xf] %v466
    %483 = vst [vmem:[%s3 + $0x20] sm:$0xf] %v467
    %484 = vst [vmem:[%s3 + $0x24] sm:$0xf] %v468
    %485 = vst [vmem:[%s3 + $0x28] sm:$0xf] %v469
    %486 = vst [vmem:[%s3 + $0x2c] sm:$0xf] %v470
    %487 = vst [vmem:[%s3 + $0x30] sm:$0xf] %v471
    %488 = vst [vmem:[%s3 + $0x34] sm:$0xf] %v472
    %489 = vst [vmem:[%s3 + $0x38] sm:$0xf] %v473
    %490 = vst [vmem:[%s3 + $0x3c] sm:$0xf] %v474
  $region21: #{res_bottleneck_forward.4} parent=0 // pred_fallthru
    _
  // Predicated region
  $region22: #{res_bottleneck_forward.4} parent=0 // pred_check
    _
  $region23: #{res_bottleneck_forward.4} parent=0 // pred_check_branch
    %492 = sbr.rel (0) target = $region25
  $region24: #{res_bottleneck_forward.4} parent=0 // pred_region
    _
  $region25: #{res_bottleneck_forward.4} parent=0 // pred_fallthru
    _
  // Predicated region
  $region26: #{res_bottleneck_forward.4} parent=0 // pred_check
    _
  $region27: #{res_bottleneck_forward.4} parent=0 // pred_check_branch
    %494 = sbr.rel (0) target = $region29
  $region28: #{res_bottleneck_forward.4} parent=0 // pred_region
    _
  $region29: #{res_bottleneck_forward.4} parent=0 // pred_fallthru
    _

// kernel: res_bottleneck_forward.5
$region0: #{res_bottleneck_forward.5}
  #allocation0 [shape = 'u32[]', space=smem, size = 0x4, offset = 0x4, fixed_abs, tag = 'smem constant byte address 0x4 - core index']
  #allocation1 [shape = 'u32[72,128]{1,0:T(1,128)}', space=vmem, size = 0x9000, scoped, tag = 'internal scratch']
  #allocation2 [shape = 'f32[128,128]{1,0:T(8,128)}', space=vmem, size = 0x10000, scoped, tag = 'scratch operand']
  %s0 = inlined_call_operand.vmem [shape: bf16[128,128], index: 0, kind: input, shape index: {}]
  %s1 = inlined_call_operand.vmem [shape: bf16[128,128], index: 1, kind: input, shape index: {}]
  %s2 = inlined_call_operand.vmem [shape: f32[1,128], index: 2, kind: input, shape index: {}]
  %s3 = inlined_call_operand.hbm [shape: f32[128,128], index: 3, kind: output, shape index: {}]
  %s4 = sld [smem:[#allocation0]]
  $region30: #{res_bottleneck_forward.5} parent=0
    _
  %s6 = ssub.s32 1, %s4
  %s7 = scalar_select 0, %s6, %s4
  $region1: #{res_bottleneck_forward.5} parent=0
    #allocation3 [shape = 'u8[65536]{0}', space=vmem, size = 0x10000, scoped, tag = 'output window, operand 0, single buffered']
    #allocation4 [shape = 's32[1]{0}', space=sflag, size = 0x4, scoped, tag = 'scoped memory for res_bottleneck_forward.5']
    %8 = vsyncpa [#allocation4], 0
    // Predicated region
    $region2: #{res_bottleneck_forward.5} parent=1 // pred_check
      _
    $region3: #{res_bottleneck_forward.5} parent=1 // pred_check_branch
      %10 = sbr.rel (0) target = $region5
    $region4: #{res_bottleneck_forward.5} parent=1 // pred_region
      _
    $region5: #{res_bottleneck_forward.5} parent=1 // pred_fallthru
      _
    // Predicated region
    $region6: #{res_bottleneck_forward.5} parent=1 // pred_check
      _
    $region7: #{res_bottleneck_forward.5} parent=1 // pred_check_branch
      %12 = sbr.rel (0) target = $region9
    $region8: #{res_bottleneck_forward.5} parent=1 // pred_region
      _
    $region9: #{res_bottleneck_forward.5} parent=1 // pred_fallthru
      _
    // Predicated region
    $region10: #{res_bottleneck_forward.5} parent=1 // pred_check
      _
    $region11: #{res_bottleneck_forward.5} parent=1 // pred_check_branch
      %14 = sbr.rel (0) target = $region13
    $region12: #{res_bottleneck_forward.5} parent=1 // pred_region
      _
    $region13: #{res_bottleneck_forward.5} parent=1 // pred_fallthru
      _
    %p15 = scmp.eq.s32.totalorder 0, 0
    // Predicated region
    $region14: #{res_bottleneck_forward.5} parent=1 // pred_check
      %p16 = pneg %p15
    $region15: #{res_bottleneck_forward.5} parent=1 // pred_check_branch
      %18 = sbr.rel (%p16) target = $region17
    $region16: #{res_bottleneck_forward.5} parent=1 // pred_region
      %19 = vst [vmem:[#allocation2] sm:$0xff] 0.0
      %20 = vst [vmem:[#allocation2 + $0x8] sm:$0xff] 0.0
      %21 = vst [vmem:[#allocation2 + $0x10] sm:$0xff] 0.0
      %22 = vst [vmem:[#allocation2 + $0x18] sm:$0xff] 0.0
      %23 = vst [vmem:[#allocation2 + $0x20] sm:$0xff] 0.0
      %24 = vst [vmem:[#allocation2 + $0x28] sm:$0xff] 0.0
      %25 = vst [vmem:[#allocation2 + $0x30] sm:$0xff] 0.0
      %26 = vst [vmem:[#allocation2 + $0x38] sm:$0xff] 0.0
      %27 = vst [vmem:[#allocation2 + $0x40] sm:$0xff] 0.0
      %28 = vst [vmem:[#allocation2 + $0x48] sm:$0xff] 0.0
      %29 = vst [vmem:[#allocation2 + $0x50] sm:$0xff] 0.0
      %30 = vst [vmem:[#allocation2 + $0x58] sm:$0xff] 0.0
      %31 = vst [vmem:[#allocation2 + $0x60] sm:$0xff] 0.0
      %32 = vst [vmem:[#allocation2 + $0x68] sm:$0xff] 0.0
      %33 = vst [vmem:[#allocation2 + $0x70] sm:$0xff] 0.0
      %34 = vst [vmem:[#allocation2 + $0x78] sm:$0xff] 0.0
    $region17: #{res_bottleneck_forward.5} parent=1 // pred_fallthru
      _
    %v35 = vld [vmem:[#allocation2] sm:$0xff]
    %v36 = vld [vmem:[#allocation2 + $0x8] sm:$0xff]
    %v37 = vld [vmem:[#allocation2 + $0x10] sm:$0xff]
    %v38 = vld [vmem:[#allocation2 + $0x18] sm:$0xff]
    %v39 = vld [vmem:[#allocation2 + $0x20] sm:$0xff]
    %v40 = vld [vmem:[#allocation2 + $0x28] sm:$0xff]
    %v41 = vld [vmem:[#allocation2 + $0x30] sm:$0xff]
    %v42 = vld [vmem:[#allocation2 + $0x38] sm:$0xff]
    %v43 = vld [vmem:[#allocation2 + $0x40] sm:$0xff]
    %v44 = vld [vmem:[#allocation2 + $0x48] sm:$0xff]
    %v45 = vld [vmem:[#allocation2 + $0x50] sm:$0xff]
    %v46 = vld [vmem:[#allocation2 + $0x58] sm:$0xff]
    %v47 = vld [vmem:[#allocation2 + $0x60] sm:$0xff]
    %v48 = vld [vmem:[#allocation2 + $0x68] sm:$0xff]
    %v49 = vld [vmem:[#allocation2 + $0x70] sm:$0xff]
    %v50 = vld [vmem:[#allocation2 + $0x78] sm:$0xff]
    %v51 = vld [vmem:[%s0] sm:$0xf]
    %v52 = vld [vmem:[%s0 + $0x4] sm:$0xf]
    %v53 = vld [vmem:[%s0 + $0x8] sm:$0xf]
    %v54 = vld [vmem:[%s0 + $0xc] sm:$0xf]
    %v55 = vld [vmem:[%s0 + $0x10] sm:$0xf]
    %v56 = vld [vmem:[%s0 + $0x14] sm:$0xf]
    %v57 = vld [vmem:[%s0 + $0x18] sm:$0xf]
    %v58 = vld [vmem:[%s0 + $0x1c] sm:$0xf]
    %v59 = vld [vmem:[%s0 + $0x20] sm:$0xf]
    %v60 = vld [vmem:[%s0 + $0x24] sm:$0xf]
    %v61 = vld [vmem:[%s0 + $0x28] sm:$0xf]
    %v62 = vld [vmem:[%s0 + $0x2c] sm:$0xf]
    %v63 = vld [vmem:[%s0 + $0x30] sm:$0xf]
    %v64 = vld [vmem:[%s0 + $0x34] sm:$0xf]
    %v65 = vld [vmem:[%s0 + $0x38] sm:$0xf]
    %v66 = vld [vmem:[%s0 + $0x3c] sm:$0xf]
    %v67 = vld [vmem:[%s1] sm:$0xf]
    %v68 = vld [vmem:[%s1 + $0x4] sm:$0xf]
    %v69 = vld [vmem:[%s1 + $0x8] sm:$0xf]
    %v70 = vld [vmem:[%s1 + $0xc] sm:$0xf]
    %v71 = vld [vmem:[%s1 + $0x10] sm:$0xf]
    %v72 = vld [vmem:[%s1 + $0x14] sm:$0xf]
    %v73 = vld [vmem:[%s1 + $0x18] sm:$0xf]
    %v74 = vld [vmem:[%s1 + $0x1c] sm:$0xf]
    %v75 = vld [vmem:[%s1 + $0x20] sm:$0xf]
    %v76 = vld [vmem:[%s1 + $0x24] sm:$0xf]
    %v77 = vld [vmem:[%s1 + $0x28] sm:$0xf]
    %v78 = vld [vmem:[%s1 + $0x2c] sm:$0xf]
    %v79 = vld [vmem:[%s1 + $0x30] sm:$0xf]
    %v80 = vld [vmem:[%s1 + $0x34] sm:$0xf]
    %v81 = vld [vmem:[%s1 + $0x38] sm:$0xf]
    %v82 = vld [vmem:[%s1 + $0x3c] sm:$0xf]
    %v99 = vunpack.c.l.b16 %v51
    %v100 = vunpack.c.l.b16 %v52
    %v101 = vunpack.c.l.b16 %v53
    %v102 = vunpack.c.l.b16 %v54
    %v103 = vunpack.c.l.b16 %v55
    %v104 = vunpack.c.l.b16 %v56
    %v105 = vunpack.c.l.b16 %v57
    %v106 = vunpack.c.l.b16 %v58
    %v107 = vunpack.c.l.b16 %v59
    %v108 = vunpack.c.l.b16 %v60
    %v109 = vunpack.c.l.b16 %v61
    %v110 = vunpack.c.l.b16 %v62
    %v111 = vunpack.c.l.b16 %v63
    %v112 = vunpack.c.l.b16 %v64
    %v113 = vunpack.c.l.b16 %v65
    %v114 = vunpack.c.l.b16 %v66
    %v115 = vpack.c.b16 %v100, %v99
    %v116 = vpack.c.b16 %v102, %v101
    %v117 = vpack.c.b16 %v104, %v103
    %v118 = vpack.c.b16 %v106, %v105
    %v119 = vpack.c.b16 %v108, %v107
    %v120 = vpack.c.b16 %v110, %v109
    %v121 = vpack.c.b16 %v112, %v111
    %v122 = vpack.c.b16 %v114, %v113
    %v147 = vunpack.c.l.b16 %v67
    %v148 = vunpack.c.l.b16 %v68
    %v149 = vunpack.c.l.b16 %v69
    %v150 = vunpack.c.l.b16 %v70
    %v151 = vunpack.c.l.b16 %v71
    %v152 = vunpack.c.l.b16 %v72
    %v153 = vunpack.c.l.b16 %v73
    %v154 = vunpack.c.l.b16 %v74
    %v155 = vunpack.c.l.b16 %v75
    %v156 = vunpack.c.l.b16 %v76
    %v157 = vunpack.c.l.b16 %v77
    %v158 = vunpack.c.l.b16 %v78
    %v159 = vunpack.c.l.b16 %v79
    %v160 = vunpack.c.l.b16 %v80
    %v161 = vunpack.c.l.b16 %v81
    %v162 = vunpack.c.l.b16 %v82
    %v163 = vpack.c.b16 %v148, %v147
    %v164 = vpack.c.b16 %v150, %v149
    %v165 = vpack.c.b16 %v152, %v151
    %v166 = vpack.c.b16 %v154, %v153
    %v167 = vpack.c.b16 %v156, %v155
    %v168 = vpack.c.b16 %v158, %v157
    %v169 = vpack.c.b16 %v160, %v159
    %v170 = vpack.c.b16 %v162, %v161
    %179 = vmatpush.bf16.msra.mxu0 %v170
    %180 = vmatpush.bf16.msra.mxu0 %v169
    %181 = vmatpush.bf16.msra.mxu0 %v168
    %182 = vmatpush.bf16.msra.mxu0 %v167
    %183 = vmatpush.bf16.msra.mxu0 %v166
    %184 = vmatpush.bf16.msra.mxu0 %v165
    %185 = vmatpush.bf16.msra.mxu0 %v164
    %186 = vmatpush.bf16.msra.mxu0 %v163
    %187 = vmatmul.bf16.gmra.mxu0 %v115
    %v188 = vpop.f32.mrf.mxu0
    %v189 = vadd.f32 0.0, %v188
    %v190 = vpop.f32.mrf.mxu0
    %v191 = vadd.f32 0.0, %v190
    %192 = vmatmul.bf16.gmra.mxu0 %v116
    %v193 = vpop.f32.mrf.mxu0
    %v194 = vadd.f32 0.0, %v193
    %v195 = vpop.f32.mrf.mxu0
    %v196 = vadd.f32 0.0, %v195
    %197 = vmatmul.bf16.gmra.mxu0 %v117
    %v198 = vpop.f32.mrf.mxu0
    %v199 = vadd.f32 0.0, %v198
    %v200 = vpop.f32.mrf.mxu0
    %v201 = vadd.f32 0.0, %v200
    %202 = vmatmul.bf16.gmra.mxu0 %v118
    %v203 = vpop.f32.mrf.mxu0
    %v204 = vadd.f32 0.0, %v203
    %v205 = vpop.f32.mrf.mxu0
    %v206 = vadd.f32 0.0, %v205
    %207 = vmatmul.bf16.gmra.mxu0 %v119
    %v208 = vpop.f32.mrf.mxu0
    %v209 = vadd.f32 0.0, %v208
    %v210 = vpop.f32.mrf.mxu0
    %v211 = vadd.f32 0.0, %v210
    %212 = vmatmul.bf16.gmra.mxu0 %v120
    %v213 = vpop.f32.mrf.mxu0
    %v214 = vadd.f32 0.0, %v213
    %v215 = vpop.f32.mrf.mxu0
    %v216 = vadd.f32 0.0, %v215
    %217 = vmatmul.bf16.gmra.mxu0 %v121
    %v218 = vpop.f32.mrf.mxu0
    %v219 = vadd.f32 0.0, %v218
    %v220 = vpop.f32.mrf.mxu0
    %v221 = vadd.f32 0.0, %v220
    %222 = vmatmul.bf16.gmra.mxu0 %v122
    %v223 = vpop.f32.mrf.mxu0
    %v224 = vadd.f32 0.0, %v223
    %v225 = vpop.f32.mrf.mxu0
    %v226 = vadd.f32 0.0, %v225
    %227 = vdwg.mxu0
    %v228 = vadd.f32 %v35, %v189
    %v229 = vadd.f32 %v36, %v191
    %v230 = vadd.f32 %v37, %v194
    %v231 = vadd.f32 %v38, %v196
    %v232 = vadd.f32 %v39, %v199
    %v233 = vadd.f32 %v40, %v201
    %v234 = vadd.f32 %v41, %v204
    %v235 = vadd.f32 %v42, %v206
    %v236 = vadd.f32 %v43, %v209
    %v237 = vadd.f32 %v44, %v211
    %v238 = vadd.f32 %v45, %v214
    %v239 = vadd.f32 %v46, %v216
    %v240 = vadd.f32 %v47, %v219
    %v241 = vadd.f32 %v48, %v221
    %v242 = vadd.f32 %v49, %v224
    %v243 = vadd.f32 %v50, %v226
    %244 = vst [vmem:[#allocation2] sm:$0xff] %v228
    %245 = vst [vmem:[#allocation2 + $0x8] sm:$0xff] %v229
    %246 = vst [vmem:[#allocation2 + $0x10] sm:$0xff] %v230
    %247 = vst [vmem:[#allocation2 + $0x18] sm:$0xff] %v231
    %248 = vst [vmem:[#allocation2 + $0x20] sm:$0xff] %v232
    %249 = vst [vmem:[#allocation2 + $0x28] sm:$0xff] %v233
    %250 = vst [vmem:[#allocation2 + $0x30] sm:$0xff] %v234
    %251 = vst [vmem:[#allocation2 + $0x38] sm:$0xff] %v235
    %252 = vst [vmem:[#allocation2 + $0x40] sm:$0xff] %v236
    %253 = vst [vmem:[#allocation2 + $0x48] sm:$0xff] %v237
    %254 = vst [vmem:[#allocation2 + $0x50] sm:$0xff] %v238
    %255 = vst [vmem:[#allocation2 + $0x58] sm:$0xff] %v239
    %256 = vst [vmem:[#allocation2 + $0x60] sm:$0xff] %v240
    %257 = vst [vmem:[#allocation2 + $0x68] sm:$0xff] %v241
    %258 = vst [vmem:[#allocation2 + $0x70] sm:$0xff] %v242
    %259 = vst [vmem:[#allocation2 + $0x78] sm:$0xff] %v243
    // Predicated region
    $region18: #{res_bottleneck_forward.5} parent=1 // pred_check
      %p260 = pneg %p15
    $region19: #{res_bottleneck_forward.5} parent=1 // pred_check_branch
      %262 = sbr.rel (%p260) target = $region21
    $region20: #{res_bottleneck_forward.5} parent=1 // pred_region
      %v263 = vld [vmem:[#allocation2] sm:$0xff]
      %v264 = vld [vmem:[#allocation2 + $0x8] sm:$0xff]
      %v265 = vld [vmem:[#allocation2 + $0x10] sm:$0xff]
      %v266 = vld [vmem:[#allocation2 + $0x18] sm:$0xff]
      %v267 = vld [vmem:[#allocation2 + $0x20] sm:$0xff]
      %v268 = vld [vmem:[#allocation2 + $0x28] sm:$0xff]
      %v269 = vld [vmem:[#allocation2 + $0x30] sm:$0xff]
      %v270 = vld [vmem:[#allocation2 + $0x38] sm:$0xff]
      %v271 = vld [vmem:[#allocation2 + $0x40] sm:$0xff]
      %v272 = vld [vmem:[#allocation2 + $0x48] sm:$0xff]
      %v273 = vld [vmem:[#allocation2 + $0x50] sm:$0xff]
      %v274 = vld [vmem:[#allocation2 + $0x58] sm:$0xff]
      %v275 = vld [vmem:[#allocation2 + $0x60] sm:$0xff]
      %v276 = vld [vmem:[#allocation2 + $0x68] sm:$0xff]
      %v277 = vld [vmem:[#allocation2 + $0x70] sm:$0xff]
      %v278 = vld [vmem:[#allocation2 + $0x78] sm:$0xff]
      %v279 = vld [vmem:[%s2] sm:$0x1]
      %v281 = vperm.slane %v279, 0
      %v283 = vadd.f32 %v263, %v281
      %v284 = vadd.f32 %v264, %v281
      %v285 = vadd.f32 %v265, %v281
      %v286 = vadd.f32 %v266, %v281
      %v287 = vadd.f32 %v267, %v281
      %v288 = vadd.f32 %v268, %v281
      %v289 = vadd.f32 %v269, %v281
      %v290 = vadd.f32 %v270, %v281
      %v291 = vadd.f32 %v271, %v281
      %v292 = vadd.f32 %v272, %v281
      %v293 = vadd.f32 %v273, %v281
      %v294 = vadd.f32 %v274, %v281
      %v295 = vadd.f32 %v275, %v281
      %v296 = vadd.f32 %v276, %v281
      %v297 = vadd.f32 %v277, %v281
      %v298 = vadd.f32 %v278, %v281
      %299 = vst [vmem:[#allocation3] sm:$0xff] %v283
      %300 = vst [vmem:[#allocation3 + $0x8] sm:$0xff] %v284
      %301 = vst [vmem:[#allocation3 + $0x10] sm:$0xff] %v285
      %302 = vst [vmem:[#allocation3 + $0x18] sm:$0xff] %v286
      %303 = vst [vmem:[#allocation3 + $0x20] sm:$0xff] %v287
      %304 = vst [vmem:[#allocation3 + $0x28] sm:$0xff] %v288
      %305 = vst [vmem:[#allocation3 + $0x30] sm:$0xff] %v289
      %306 = vst [vmem:[#allocation3 + $0x38] sm:$0xff] %v290
      %307 = vst [vmem:[#allocation3 + $0x40] sm:$0xff] %v291
      %308 = vst [vmem:[#allocation3 + $0x48] sm:$0xff] %v292
      %309 = vst [vmem:[#allocation3 + $0x50] sm:$0xff] %v293
      %310 = vst [vmem:[#allocation3 + $0x58] sm:$0xff] %v294
      %311 = vst [vmem:[#allocation3 + $0x60] sm:$0xff] %v295
      %312 = vst [vmem:[#allocation3 + $0x68] sm:$0xff] %v296
      %313 = vst [vmem:[#allocation3 + $0x70] sm:$0xff] %v297
      %314 = vst [vmem:[#allocation3 + $0x78] sm:$0xff] %v298
    $region21: #{res_bottleneck_forward.5} parent=1 // pred_fallthru
      _
    // Predicated region
    $region22: #{res_bottleneck_forward.5} parent=1 // pred_check
      _
    $region23: #{res_bottleneck_forward.5} parent=1 // pred_check_branch
      %316 = sbr.rel (0) target = $region25
    $region24: #{res_bottleneck_forward.5} parent=1 // pred_region
      %318 = vsyncadd [#allocation4], 0
      %s319 = sshll.u32 [#allocation3], 4
      %s320 = int_to_ptr.vmem [resolvable:$true] %s319
      %s321 = sshll.u32 %s3, 4
      %s322 = int_to_ptr.hbm [resolvable:$true] %s321
      %327 = dma.vmem_to_hbm [thread:$0]  %s320, 2048, %s322, [#allocation4], 128, 128, 8
    $region25: #{res_bottleneck_forward.5} parent=1 // pred_fallthru
      _
    // Predicated region
    $region26: #{res_bottleneck_forward.5} parent=1 // pred_check
      _
    $region27: #{res_bottleneck_forward.5} parent=1 // pred_check_branch
      %329 = sbr.rel (0) target = $region29
    $region28: #{res_bottleneck_forward.5} parent=1 // pred_region
      %331 = dma.done [#allocation4], 2048
    $region29: #{res_bottleneck_forward.5} parent=1 // pred_fallthru
      _
    %332 = vsyncpa [#allocation4], 1

</llo_original>
